<compile_context>
chip_gen: v6e
topology: v6e:2x2x1
jax: 0.10.0
libtpu: 0.0.40
codegen_flags: <defaults>
</compile_context>

<pallas_src>
import jax
import jax.numpy as jnp
from jax.experimental import pallas as pl
from jax.experimental.pallas import tpu as pltpu

# ---- model dimensions (small, consistent with the forward) -------------
B = 2          # batch
T0 = 4         # prompt length
S_ENC = 8      # encoder sequence length
D = 128        # hidden size (lane aligned)
V = 256        # vocab size
MAX_LEN = 10   # max total sequence length (KV-cache capacity)
EOS_ID = 0
MAX_STEPS = MAX_LEN - T0       # max tokens generated before the loop must stop

_TOK_LANES = 128               # token output replicated across lanes (dense store)
_SCALE = 1.0 / float(D) ** 0.5  # folded 1/sqrt(D)
_NEG_INF = -1e30


# ----------------------- persistent decode-loop kernel -------------------
def _decode_loop_kernel(prompt_ref, last_ref, enc_ref, amask_ref,
                        wqkv_ref, wlm_ref, emb_ref,
                        tok_ref,
                        kc_ref, vc_ref, cur_ref, unf_ref):
    step = pl.program_id(0)
    cur_pos = T0 - 1 + step          # cache slot of the token processed this step

    # ---- one-time init on the first grid step: prompt K/V into the cache ----
    @pl.when(step == 0)
    def _init():
        w_kv = wqkv_ref[:, D:]                                    # [D, 2D]
        for b in range(B):                                        # B tiny & static
            # prompt is zero-padded to MAX_LEN -> whole-cache write, no slice stores
            kv_b = jnp.dot(prompt_ref[b], w_kv,
                           preferred_element_type=jnp.float32)    # [MAX_LEN, 2D]
            kc_ref[b] = kv_b[:, :D]
            vc_ref[b] = kv_b[:, D:]
        cur_ref[...] = last_ref[...]                              # last prompt token emb
        unf_ref[...] = jnp.ones((B, 1), jnp.int32)

    # ---- fused q/k/v projection of the current token (single MXU matmul) ----
    x = cur_ref[...]                                              # [B, D]
    qkv = jnp.dot(x, wqkv_ref[...], preferred_element_type=jnp.float32)   # [B, 3D]
    q = qkv[:, :D]
    k_new = qkv[:, D:2 * D]
    v_new = qkv[:, 2 * D:]

    # ---- write the current token's K/V into the cache (masked full-tile
    #      select; post-update values stay in vregs for the attention below) ----
    pos_rows = jax.lax.broadcasted_iota(jnp.int32, (B, MAX_LEN, D), 1)
    kc = jnp.where(pos_rows == cur_pos, k_new[:, None, :], kc_ref[...])
    vc = jnp.where(pos_rows == cur_pos, v_new[:, None, :], vc_ref[...])
    kc_ref[...] = kc
    vc_ref[...] = vc

    qb = (q * _SCALE)[:, None, :]                                 # [B, 1, D]

    # ---- masked self-attention over cache[0 .. cur_pos] (MXU einsums) ----
    s_self = jnp.einsum('bqd,bkd->bqk', qb, kc,
                        preferred_element_type=jnp.float32) + amask_ref[...]  # [B,1,L]
    pos = jax.lax.broadcasted_iota(jnp.int32, (B, 1, MAX_LEN), 2)
    s_self = jnp.where(pos <= cur_pos, s_self, _NEG_INF)
    m_self = jnp.max(s_self, axis=-1, keepdims=True)
    p_self = jnp.exp(s_self - m_self)                             # exact 0 where masked
    inv_self = pl.reciprocal(jnp.sum(p_self, axis=-1, keepdims=True), approx=True)
    ctx_self = jnp.einsum('bqk,bkd->bqd', p_self, vc,
                          preferred_element_type=jnp.float32) * inv_self   # [B,1,D]

    # ---- cross-attention over encoder hidden states ----
    enc = enc_ref[...]                                             # [B, S, D]
    s_x = jnp.einsum('bqd,bkd->bqk', qb, enc,
                     preferred_element_type=jnp.float32)           # [B, 1, S]
    m_x = jnp.max(s_x, axis=-1, keepdims=True)
    p_x = jnp.exp(s_x - m_x)
    inv_x = pl.reciprocal(jnp.sum(p_x, axis=-1, keepdims=True), approx=True)
    ctx_x = jnp.einsum('bqk,bkd->bqd', p_x, enc,
                       preferred_element_type=jnp.float32) * inv_x          # [B,1,D]

    # ---- fuse + LM head ----
    h = jnp.tanh(q + ctx_self[:, 0, :] + ctx_x[:, 0, :])           # [B, D]
    logits = jnp.dot(h, wlm_ref[...], preferred_element_type=jnp.float32)   # [B, V]

    # ---- greedy argmax (first max index) + EOS forcing of finished seqs ----
    col = jax.lax.broadcasted_iota(jnp.int32, (B, V), 1)
    m_l = jnp.max(logits, axis=-1, keepdims=True)
    tok = jnp.min(jnp.where(logits >= m_l, col, V), axis=-1, keepdims=True)  # [B,1]
    unf = unf_ref[...]                                             # [B, 1] int32
    tok = jnp.where(unf > 0, tok, EOS_ID)
    unf_ref[...] = jnp.where(tok == EOS_ID, 0, unf)

    # ---- emit this step's token (lane-replicated -> lane-dense store) ----
    tok_ref[0, :, :] = jnp.broadcast_to(tok, (B, _TOK_LANES))

    # ---- next step's input embedding: one-hot @ E on the MXU ----
    onehot = (col == tok).astype(jnp.float32)                      # [B, V]
    cur_ref[...] = jnp.dot(onehot, emb_ref[...], preferred_element_type=jnp.float32)


# ----------------------- pallas_call wrapper ------------------------------
def _decode_loop(prompt_emb_pad, last_emb, enc, add_mask, wqkv, wlm, emb):
    return pl.pallas_call(
        _decode_loop_kernel,
        out_shape=jax.ShapeDtypeStruct((MAX_STEPS, B, _TOK_LANES), jnp.int32),
        grid_spec=pltpu.PrefetchScalarGridSpec(
            num_scalar_prefetch=0,
            grid=(MAX_STEPS,),
            in_specs=[
                pl.BlockSpec((B, MAX_LEN, D), lambda s: (0, 0, 0)),   # padded prompt emb
                pl.BlockSpec((B, D), lambda s: (0, 0)),               # last prompt token emb
                pl.BlockSpec((B, S_ENC, D), lambda s: (0, 0, 0)),     # encoder states
                pl.BlockSpec((B, 1, MAX_LEN), lambda s: (0, 0, 0)),   # additive prompt mask
                pl.BlockSpec((D, 3 * D), lambda s: (0, 0)),           # fused Wqkv
                pl.BlockSpec((D, V), lambda s: (0, 0)),               # LM head
                pl.BlockSpec((V, D), lambda s: (0, 0)),               # embedding table
            ],
            out_specs=pl.BlockSpec((1, B, _TOK_LANES), lambda s: (s, 0, 0)),
            scratch_shapes=[
                pltpu.VMEM((B, MAX_LEN, D), jnp.float32),   # K cache (persists over grid)
                pltpu.VMEM((B, MAX_LEN, D), jnp.float32),   # V cache
                pltpu.VMEM((B, D), jnp.float32),            # current token embedding
                pltpu.VMEM((B, 1), jnp.int32),              # unfinished flags
            ],
        ),
        compiler_params=pltpu.CompilerParams(
            dimension_semantics=("arbitrary",)),
    )(prompt_emb_pad, last_emb, enc, add_mask, wqkv, wlm, emb)


# ----------------------- ChatLoopModel.forward ----------------------------
@jax.jit
def _generate(input_ids, encoder_hidden_states, attention_mask, params):
    prompt_emb = params["E"][input_ids]                               # [B, T0, D] (glue)
    last_emb = prompt_emb[:, -1, :]                                   # [B, D]
    prompt_pad = jnp.zeros((B, MAX_LEN, D), jnp.float32).at[:, :T0, :].set(prompt_emb)

    pm = jnp.ones((B, MAX_LEN), jnp.float32)
    pm = pm.at[:, :T0].set(attention_mask.astype(jnp.float32))
    add_mask = ((pm - 1.0) * 1e30)[:, None, :]                        # 0 valid, -1e30 masked

    tok_out = _decode_loop(prompt_pad, last_emb, encoder_hidden_states,
                           add_mask, params["Wqkv"], params["Wlm"], params["E"])
    gen = tok_out[:, :, 0]                                            # [MAX_STEPS, B]
    full_ids = jnp.concatenate([input_ids, gen.T.astype(input_ids.dtype)], axis=1)

    # Stop length exactly as the reference loop: break after the step at which
    # every sequence has emitted EOS, or when total length reaches MAX_LEN.
    finished_all = jnp.all(gen == EOS_ID, axis=1)                     # [MAX_STEPS]
    stop_len = jnp.where(jnp.any(finished_all),
                         T0 + jnp.argmax(finished_all) + 1, MAX_LEN)
    return full_ids, stop_len.astype(jnp.int32)


def chat_loop_forward(input_ids, encoder_hidden_states, attention_mask, params):
    """Matches ChatLoopModel.forward: prompt + greedily generated tokens,
    truncated where the original while-loop would have broken."""
    full_ids, stop_len = _generate(input_ids, encoder_hidden_states,
                                   attention_mask, params)
    # TODO(synk): the data-dependent while-loop exit cannot shorten a fixed device
    # grid; the kernel runs all MAX_STEPS steps (finished sequences are EOS-forced,
    # identical to the reference) and the variable-length cut happens here — the
    # only host sync of the whole decode.
    return full_ids[:, :int(stop_len)]


# ----------------------- deterministic parameters -------------------------
def make_params(key):
    k0, k1, k2 = jax.random.split(key, 3)
    return {
        "E":    0.02 * jax.random.normal(k0, (V, D), jnp.float32),
        "Wqkv": 0.05 * jax.random.normal(k1, (D, 3 * D), jnp.float32),   # fused q/k/v
        "Wlm":  0.02 * jax.random.normal(k2, (D, V), jnp.float32),
    }


if __name__ == "__main__":
    assert MAX_LEN > T0
    key = jax.random.PRNGKey(0)
    k_par, k_ids, k_enc = jax.random.split(key, 3)
    params = make_params(k_par)

    input_ids = jax.random.randint(k_ids, (B, T0), 1, V, dtype=jnp.int32)
    encoder_hidden_states = jax.random.normal(k_enc, (B, S_ENC, D), jnp.float32)
    attention_mask = jnp.ones((B, T0), jnp.int32)

    out_ids = chat_loop_forward(input_ids, encoder_hidden_states,
                                attention_mask, params)
    jax.block_until_ready(out_ids)
    print("KERNEL_OK")
</pallas_src>

<mosaic_0001>
module attributes {stable_mosaic.version = 11 : i64} {
  func.func @_decode_loop_kernel(%arg0: i32, %arg1: memref<2x10x128xf32, #tpu.memory_space<vmem>>, %arg2: memref<2x128xf32, #tpu.memory_space<vmem>>, %arg3: memref<2x8x128xf32, #tpu.memory_space<vmem>>, %arg4: memref<2x1x10xf32, #tpu.memory_space<vmem>>, %arg5: memref<128x384xf32, #tpu.memory_space<vmem>>, %arg6: memref<128x256xf32, #tpu.memory_space<vmem>>, %arg7: memref<256x128xf32, #tpu.memory_space<vmem>>, %arg8: memref<1x2x128xi32, #tpu.memory_space<vmem>>, %arg9: memref<2x10x128xf32, #tpu.memory_space<vmem>>, %arg10: memref<2x10x128xf32, #tpu.memory_space<vmem>>, %arg11: memref<2x128xf32, #tpu.memory_space<vmem>>, %arg12: memref<2x1xi32, #tpu.memory_space<vmem>>) attributes {dimension_semantics = [#tpu.dimension_semantics<arbitrary>], iteration_bounds = array<i64: 6>, scalar_prefetch = 0 : i64, scratch_operands = 4 : i64, tpu.core_type = #tpu.core_type<tc>, window_params = [{pipeline_mode = #tpu.pipeline_mode<synchronous>, transform_indices = @transform_0, window_bounds = array<i64: 2, 10, 128>}, {pipeline_mode = #tpu.pipeline_mode<synchronous>, transform_indices = @transform_1, window_bounds = array<i64: 2, 128>}, {pipeline_mode = #tpu.pipeline_mode<synchronous>, transform_indices = @transform_2, window_bounds = array<i64: 2, 8, 128>}, {pipeline_mode = #tpu.pipeline_mode<synchronous>, transform_indices = @transform_3, window_bounds = array<i64: 2, 1, 10>}, {pipeline_mode = #tpu.pipeline_mode<synchronous>, transform_indices = @transform_4, window_bounds = array<i64: 128, 384>}, {pipeline_mode = #tpu.pipeline_mode<synchronous>, transform_indices = @transform_5, window_bounds = array<i64: 128, 256>}, {pipeline_mode = #tpu.pipeline_mode<synchronous>, transform_indices = @transform_6, window_bounds = array<i64: 256, 128>}, {transform_indices = @transform_7, window_bounds = array<i64: 1, 2, 128>}]} {
    %c3_i32 = arith.constant 3 : i32
    %0 = arith.addi %c3_i32, %arg0 : i32
    %c0_i32 = arith.constant 0 : i32
    %1 = arith.cmpi eq, %arg0, %c0_i32 : i32
    %2 = arith.extui %1 : i1 to i32
    %c0_i32_0 = arith.constant 0 : i32
    %3 = arith.cmpi ne, %2, %c0_i32_0 : i32
    scf.if %3 {
      %c0_53 = arith.constant 0 : index
      %c128 = arith.constant 128 : index
      %100 = vector.load %arg5[%c0_53, %c128] : memref<128x384xf32, #tpu.memory_space<vmem>>, vector<128x256xf32>
      %c0_54 = arith.constant 0 : index
      %c0_55 = arith.constant 0 : index
      %c0_56 = arith.constant 0 : index
      %101 = vector.load %arg1[%c0_54, %c0_55, %c0_56] : memref<2x10x128xf32, #tpu.memory_space<vmem>>, vector<1x10x128xf32>
      %102 = vector.shape_cast %101 : vector<1x10x128xf32> to vector<10x128xf32>
      %cst_57 = arith.constant dense<0.000000e+00> : vector<10x256xf32>
      %103 = tpu.matmul %102, %100, %cst_57 {dimension_numbers = #tpu.dot_dimension_numbers<[1], [0], [0], [1], [0, 0, 1, 1], [], []>} : vector<10x128xf32>, vector<128x256xf32>, vector<10x256xf32> -> vector<10x256xf32>
      %104 = vector.extract_strided_slice %103 {offsets = [0, 0], sizes = [10, 128], strides = [1, 1]} : vector<10x256xf32> to vector<10x128xf32>
      %c0_58 = arith.constant 0 : index
      %c0_59 = arith.constant 0 : index
      %c0_60 = arith.constant 0 : index
      %105 = vector.load %arg9[%c0_58, %c0_59, %c0_60] : memref<2x10x128xf32, #tpu.memory_space<vmem>>, vector<1x10x128xf32>
      %106 = vector.shape_cast %105 : vector<1x10x128xf32> to vector<10x128xf32>
      %107 = vector.shape_cast %104 : vector<10x128xf32> to vector<1x10x128xf32>
      tpu.vector_store %arg9[%c0_58, %c0_59, %c0_60], %107 {strides = array<i32>} : memref<2x10x128xf32, #tpu.memory_space<vmem>>, vector<1x10x128xf32>,
      %108 = vector.extract_strided_slice %103 {offsets = [0, 128], sizes = [10, 128], strides = [1, 1]} : vector<10x256xf32> to vector<10x128xf32>
      %c0_61 = arith.constant 0 : index
      %c0_62 = arith.constant 0 : index
      %c0_63 = arith.constant 0 : index
      %109 = vector.load %arg10[%c0_61, %c0_62, %c0_63] : memref<2x10x128xf32, #tpu.memory_space<vmem>>, vector<1x10x128xf32>
      %110 = vector.shape_cast %109 : vector<1x10x128xf32> to vector<10x128xf32>
      %111 = vector.shape_cast %108 : vector<10x128xf32> to vector<1x10x128xf32>
      tpu.vector_store %arg10[%c0_61, %c0_62, %c0_63], %111 {strides = array<i32>} : memref<2x10x128xf32, #tpu.memory_space<vmem>>, vector<1x10x128xf32>,
      %c1 = arith.constant 1 : index
      %c0_64 = arith.constant 0 : index
      %c0_65 = arith.constant 0 : index
      %112 = vector.load %arg1[%c1, %c0_64, %c0_65] : memref<2x10x128xf32, #tpu.memory_space<vmem>>, vector<1x10x128xf32>
      %113 = vector.shape_cast %112 : vector<1x10x128xf32> to vector<10x128xf32>
      %cst_66 = arith.constant dense<0.000000e+00> : vector<10x256xf32>
      %114 = tpu.matmul %113, %100, %cst_66 {dimension_numbers = #tpu.dot_dimension_numbers<[1], [0], [0], [1], [0, 0, 1, 1], [], []>} : vector<10x128xf32>, vector<128x256xf32>, vector<10x256xf32> -> vector<10x256xf32>
      %115 = vector.extract_strided_slice %114 {offsets = [0, 0], sizes = [10, 128], strides = [1, 1]} : vector<10x256xf32> to vector<10x128xf32>
      %c1_67 = arith.constant 1 : index
      %c0_68 = arith.constant 0 : index
      %c0_69 = arith.constant 0 : index
      %116 = vector.load %arg9[%c1_67, %c0_68, %c0_69] : memref<2x10x128xf32, #tpu.memory_space<vmem>>, vector<1x10x128xf32>
      %117 = vector.shape_cast %116 : vector<1x10x128xf32> to vector<10x128xf32>
      %118 = vector.shape_cast %115 : vector<10x128xf32> to vector<1x10x128xf32>
      tpu.vector_store %arg9[%c1_67, %c0_68, %c0_69], %118 {strides = array<i32>} : memref<2x10x128xf32, #tpu.memory_space<vmem>>, vector<1x10x128xf32>,
      %119 = vector.extract_strided_slice %114 {offsets = [0, 128], sizes = [10, 128], strides = [1, 1]} : vector<10x256xf32> to vector<10x128xf32>
      %c1_70 = arith.constant 1 : index
      %c0_71 = arith.constant 0 : index
      %c0_72 = arith.constant 0 : index
      %120 = vector.load %arg10[%c1_70, %c0_71, %c0_72] : memref<2x10x128xf32, #tpu.memory_space<vmem>>, vector<1x10x128xf32>
      %121 = vector.shape_cast %120 : vector<1x10x128xf32> to vector<10x128xf32>
      %122 = vector.shape_cast %119 : vector<10x128xf32> to vector<1x10x128xf32>
      tpu.vector_store %arg10[%c1_70, %c0_71, %c0_72], %122 {strides = array<i32>} : memref<2x10x128xf32, #tpu.memory_space<vmem>>, vector<1x10x128xf32>,
      %c0_73 = arith.constant 0 : index
      %c0_74 = arith.constant 0 : index
      %123 = vector.load %arg2[%c0_73, %c0_74] : memref<2x128xf32, #tpu.memory_space<vmem>>, vector<2x128xf32>
      %c0_75 = arith.constant 0 : index
      %c0_76 = arith.constant 0 : index
      %124 = vector.load %arg11[%c0_75, %c0_76] : memref<2x128xf32, #tpu.memory_space<vmem>>, vector<2x128xf32>
      tpu.vector_store %arg11[%c0_75, %c0_76], %123 {strides = array<i32>} : memref<2x128xf32, #tpu.memory_space<vmem>>, vector<2x128xf32>,
      %c1_i32 = arith.constant 1 : i32
      %125 = vector.broadcast %c1_i32 : i32 to vector<2x1xi32>
      %c0_77 = arith.constant 0 : index
      %c0_78 = arith.constant 0 : index
      %126 = vector.load %arg12[%c0_77, %c0_78] : memref<2x1xi32, #tpu.memory_space<vmem>>, vector<2x1xi32>
      tpu.vector_store %arg12[%c0_77, %c0_78], %125 {strides = array<i32>} : memref<2x1xi32, #tpu.memory_space<vmem>>, vector<2x1xi32>,
    } else {
    }
    %c0 = arith.constant 0 : index
    %c0_1 = arith.constant 0 : index
    %4 = vector.load %arg11[%c0, %c0_1] : memref<2x128xf32, #tpu.memory_space<vmem>>, vector<2x128xf32>
    %c0_2 = arith.constant 0 : index
    %c0_3 = arith.constant 0 : index
    %5 = vector.load %arg5[%c0_2, %c0_3] : memref<128x384xf32, #tpu.memory_space<vmem>>, vector<128x384xf32>
    %cst = arith.constant dense<0.000000e+00> : vector<2x384xf32>
    %6 = tpu.matmul %4, %5, %cst {dimension_numbers = #tpu.dot_dimension_numbers<[1], [0], [0], [1], [0, 0, 1, 1], [], []>} : vector<2x128xf32>, vector<128x384xf32>, vector<2x384xf32> -> vector<2x384xf32>
    %7 = vector.extract_strided_slice %6 {offsets = [0, 0], sizes = [2, 128], strides = [1, 1]} : vector<2x384xf32> to vector<2x128xf32>
    %8 = vector.extract_strided_slice %6 {offsets = [0, 128], sizes = [2, 128], strides = [1, 1]} : vector<2x384xf32> to vector<2x128xf32>
    %9 = vector.extract_strided_slice %6 {offsets = [0, 256], sizes = [2, 128], strides = [1, 1]} : vector<2x384xf32> to vector<2x128xf32>
    %10 = tpu.iota {dimensions = array<i32: 1>} : vector<2x10x128xi32>
    %11 = vector.broadcast %0 : i32 to vector<2x10x128xi32>
    %12 = arith.cmpi eq, %10, %11 : vector<2x10x128xi32>
    %13 = vector.shape_cast %8 : vector<2x128xf32> to vector<2x1x128xf32>
    %c0_4 = arith.constant 0 : index
    %c0_5 = arith.constant 0 : index
    %c0_6 = arith.constant 0 : index
    %14 = vector.load %arg9[%c0_4, %c0_5, %c0_6] : memref<2x10x128xf32, #tpu.memory_space<vmem>>, vector<2x10x128xf32>
    %15 = vector.shape_cast %13 : vector<2x1x128xf32> to vector<2x1x128xf32>
    %16 = vector.broadcast %15 : vector<2x1x128xf32> to vector<2x10x128xf32>
    %17 = arith.select %12, %16, %14 : vector<2x10x128xi1>, vector<2x10x128xf32>
    %18 = vector.broadcast %0 : i32 to vector<2x10x128xi32>
    %19 = arith.cmpi eq, %10, %18 : vector<2x10x128xi32>
    %20 = vector.shape_cast %9 : vector<2x128xf32> to vector<2x1x128xf32>
    %c0_7 = arith.constant 0 : index
    %c0_8 = arith.constant 0 : index
    %c0_9 = arith.constant 0 : index
    %21 = vector.load %arg10[%c0_7, %c0_8, %c0_9] : memref<2x10x128xf32, #tpu.memory_space<vmem>>, vector<2x10x128xf32>
    %22 = vector.shape_cast %20 : vector<2x1x128xf32> to vector<2x1x128xf32>
    %23 = vector.broadcast %22 : vector<2x1x128xf32> to vector<2x10x128xf32>
    %24 = arith.select %19, %23, %21 : vector<2x10x128xi1>, vector<2x10x128xf32>
    %c0_10 = arith.constant 0 : index
    %c0_11 = arith.constant 0 : index
    %c0_12 = arith.constant 0 : index
    %25 = vector.load %arg9[%c0_10, %c0_11, %c0_12] : memref<2x10x128xf32, #tpu.memory_space<vmem>>, vector<2x10x128xf32>
    tpu.vector_store %arg9[%c0_10, %c0_11, %c0_12], %17 {strides = array<i32>} : memref<2x10x128xf32, #tpu.memory_space<vmem>>, vector<2x10x128xf32>,
    %c0_13 = arith.constant 0 : index
    %c0_14 = arith.constant 0 : index
    %c0_15 = arith.constant 0 : index
    %26 = vector.load %arg10[%c0_13, %c0_14, %c0_15] : memref<2x10x128xf32, #tpu.memory_space<vmem>>, vector<2x10x128xf32>
    tpu.vector_store %arg10[%c0_13, %c0_14, %c0_15], %24 {strides = array<i32>} : memref<2x10x128xf32, #tpu.memory_space<vmem>>, vector<2x10x128xf32>,
    %cst_16 = arith.constant 0.0883883461 : f32
    %27 = vector.broadcast %cst_16 : f32 to vector<2x128xf32>
    %28 = arith.mulf %7, %27 : vector<2x128xf32>
    %29 = vector.shape_cast %28 : vector<2x128xf32> to vector<2x1x128xf32>
    "tpu.trace_start"() <{level = 10 : i32, message = "bqd,bkd->bqk"}> : () -> ()
    %cst_17 = arith.constant dense<0.000000e+00> : vector<2x1x10xf32>
    %30 = tpu.matmul %29, %17, %cst_17 {dimension_numbers = #tpu.dot_dimension_numbers<[2], [2], [1], [1], [0, 0, 0, 1, 1, 1], [0], [0]>} : vector<2x1x128xf32>, vector<2x10x128xf32>, vector<2x1x10xf32> -> vector<2x1x10xf32>
    "tpu.trace_stop"() : () -> ()
    %c0_18 = arith.constant 0 : index
    %c0_19 = arith.constant 0 : index
    %c0_20 = arith.constant 0 : index
    %31 = vector.load %arg4[%c0_18, %c0_19, %c0_20] : memref<2x1x10xf32, #tpu.memory_space<vmem>>, vector<2x1x10xf32>
    %32 = arith.addf %30, %31 : vector<2x1x10xf32>
    %33 = tpu.iota {dimensions = array<i32: 2>} : vector<2x1x10xi32>
    %34 = vector.broadcast %0 : i32 to vector<2x1x10xi32>
    %35 = arith.cmpi sle, %33, %34 : vector<2x1x10xi32>
    %cst_21 = arith.constant -1.000000e+30 : f32
    %36 = vector.broadcast %cst_21 : f32 to vector<2x1x10xf32>
    %37 = arith.select %35, %32, %36 : vector<2x1x10xi1>, vector<2x1x10xf32>
    %cst_22 = arith.constant dense<0xFF800000> : vector<2x1xf32>
    %38 = vector.multi_reduction <maximumf>, %37, %cst_22 [2] : vector<2x1x10xf32> to vector<2x1xf32>
    %39 = vector.shape_cast %38 : vector<2x1xf32> to vector<2x1x1xf32>
    %40 = vector.broadcast %39 : vector<2x1x1xf32> to vector<2x1x10xf32>
    %41 = arith.subf %37, %40 : vector<2x1x10xf32>
    %42 = math.exp %41 : vector<2x1x10xf32>
    %cst_23 = arith.constant dense<0.000000e+00> : vector<2x1xf32>
    %43 = vector.multi_reduction <add>, %42, %cst_23 [2] : vector<2x1x10xf32> to vector<2x1xf32>
    %44 = vector.shape_cast %43 : vector<2x1xf32> to vector<2x1x1xf32>
    %45 = tpu.reciprocal %44 {approx = true} : vector<2x1x1xf32> -> vector<2x1x1xf32>
    "tpu.trace_start"() <{level = 10 : i32, message = "bqk,bkd->bqd"}> : () -> ()
    %cst_24 = arith.constant dense<0.000000e+00> : vector<2x1x128xf32>
    %46 = tpu.matmul %42, %24, %cst_24 {dimension_numbers = #tpu.dot_dimension_numbers<[2], [1], [1], [2], [0, 0, 0, 1, 1, 2], [0], [0]>} : vector<2x1x10xf32>, vector<2x10x128xf32>, vector<2x1x128xf32> -> vector<2x1x128xf32>
    "tpu.trace_stop"() : () -> ()
    %47 = vector.broadcast %45 : vector<2x1x1xf32> to vector<2x1x128xf32>
    %48 = arith.mulf %46, %47 : vector<2x1x128xf32>
    %c0_25 = arith.constant 0 : index
    %c0_26 = arith.constant 0 : index
    %c0_27 = arith.constant 0 : index
    %49 = vector.load %arg3[%c0_25, %c0_26, %c0_27] : memref<2x8x128xf32, #tpu.memory_space<vmem>>, vector<2x8x128xf32>
    "tpu.trace_start"() <{level = 10 : i32, message = "bqd,bkd->bqk"}> : () -> ()
    %cst_28 = arith.constant dense<0.000000e+00> : vector<2x1x8xf32>
    %50 = tpu.matmul %29, %49, %cst_28 {dimension_numbers = #tpu.dot_dimension_numbers<[2], [2], [1], [1], [0, 0, 0, 1, 1, 1], [0], [0]>} : vector<2x1x128xf32>, vector<2x8x128xf32>, vector<2x1x8xf32> -> vector<2x1x8xf32>
    "tpu.trace_stop"() : () -> ()
    %cst_29 = arith.constant dense<0xFF800000> : vector<2x1xf32>
    %51 = vector.multi_reduction <maximumf>, %50, %cst_29 [2] : vector<2x1x8xf32> to vector<2x1xf32>
    %52 = vector.shape_cast %51 : vector<2x1xf32> to vector<2x1x1xf32>
    %53 = vector.broadcast %52 : vector<2x1x1xf32> to vector<2x1x8xf32>
    %54 = arith.subf %50, %53 : vector<2x1x8xf32>
    %55 = math.exp %54 : vector<2x1x8xf32>
    %cst_30 = arith.constant dense<0.000000e+00> : vector<2x1xf32>
    %56 = vector.multi_reduction <add>, %55, %cst_30 [2] : vector<2x1x8xf32> to vector<2x1xf32>
    %57 = vector.shape_cast %56 : vector<2x1xf32> to vector<2x1x1xf32>
    %58 = tpu.reciprocal %57 {approx = true} : vector<2x1x1xf32> -> vector<2x1x1xf32>
    "tpu.trace_start"() <{level = 10 : i32, message = "bqk,bkd->bqd"}> : () -> ()
    %cst_31 = arith.constant dense<0.000000e+00> : vector<2x1x128xf32>
    %59 = tpu.matmul %55, %49, %cst_31 {dimension_numbers = #tpu.dot_dimension_numbers<[2], [1], [1], [2], [0, 0, 0, 1, 1, 2], [0], [0]>} : vector<2x1x8xf32>, vector<2x8x128xf32>, vector<2x1x128xf32> -> vector<2x1x128xf32>
    "tpu.trace_stop"() : () -> ()
    %60 = vector.broadcast %58 : vector<2x1x1xf32> to vector<2x1x128xf32>
    %61 = arith.mulf %59, %60 : vector<2x1x128xf32>
    %62 = vector.shape_cast %48 : vector<2x1x128xf32> to vector<2x128xf32>
    %63 = arith.addf %7, %62 : vector<2x128xf32>
    %64 = vector.shape_cast %61 : vector<2x1x128xf32> to vector<2x128xf32>
    %65 = arith.addf %63, %64 : vector<2x128xf32>
    %66 = math.tanh %65 : vector<2x128xf32>
    %c0_32 = arith.constant 0 : index
    %c0_33 = arith.constant 0 : index
    %67 = vector.load %arg6[%c0_32, %c0_33] : memref<128x256xf32, #tpu.memory_space<vmem>>, vector<128x256xf32>
    %cst_34 = arith.constant dense<0.000000e+00> : vector<2x256xf32>
    %68 = tpu.matmul %66, %67, %cst_34 {dimension_numbers = #tpu.dot_dimension_numbers<[1], [0], [0], [1], [0, 0, 1, 1], [], []>} : vector<2x128xf32>, vector<128x256xf32>, vector<2x256xf32> -> vector<2x256xf32>
    %69 = tpu.iota {dimensions = array<i32: 1>} : vector<2x256xi32>
    %cst_35 = arith.constant dense<0xFF800000> : vector<2xf32>
    %70 = vector.multi_reduction <maximumf>, %68, %cst_35 [1] : vector<2x256xf32> to vector<2xf32>
    %71 = vector.shape_cast %70 : vector<2xf32> to vector<2x1xf32>
    %72 = vector.broadcast %71 : vector<2x1xf32> to vector<2x256xf32>
    %73 = arith.cmpf oge, %68, %72 : vector<2x256xf32>
    %c256_i32 = arith.constant 256 : i32
    %74 = vector.broadcast %c256_i32 : i32 to vector<2x256xi32>
    %75 = arith.select %73, %69, %74 : vector<2x256xi1>, vector<2x256xi32>
    %cst_36 = arith.constant dense<2147483647> : vector<2xi32>
    %76 = vector.multi_reduction <minsi>, %75, %cst_36 [1] : vector<2x256xi32> to vector<2xi32>
    %77 = vector.shape_cast %76 : vector<2xi32> to vector<2x1xi32>
    %c0_37 = arith.constant 0 : index
    %c0_38 = arith.constant 0 : index
    %78 = vector.load %arg12[%c0_37, %c0_38] : memref<2x1xi32, #tpu.memory_space<vmem>>, vector<2x1xi32>
    %c0_i32_39 = arith.constant 0 : i32
    %79 = vector.broadcast %c0_i32_39 : i32 to vector<2x1xi32>
    %80 = arith.cmpi sgt, %78, %79 : vector<2x1xi32>
    %c0_i32_40 = arith.constant 0 : i32
    %81 = vector.broadcast %c0_i32_40 : i32 to vector<2x1xi32>
    %82 = arith.select %80, %77, %81 : vector<2x1xi1>, vector<2x1xi32>
    %c0_i32_41 = arith.constant 0 : i32
    %83 = vector.broadcast %c0_i32_41 : i32 to vector<2x1xi32>
    %84 = arith.cmpi eq, %82, %83 : vector<2x1xi32>
    %c0_i32_42 = arith.constant 0 : i32
    %85 = vector.broadcast %c0_i32_42 : i32 to vector<2x1xi32>
    %86 = arith.select %84, %85, %78 : vector<2x1xi1>, vector<2x1xi32>
    %c0_43 = arith.constant 0 : index
    %c0_44 = arith.constant 0 : index
    %87 = vector.load %arg12[%c0_43, %c0_44] : memref<2x1xi32, #tpu.memory_space<vmem>>, vector<2x1xi32>
    tpu.vector_store %arg12[%c0_43, %c0_44], %86 {strides = array<i32>} : memref<2x1xi32, #tpu.memory_space<vmem>>, vector<2x1xi32>,
    %88 = vector.shape_cast %82 : vector<2x1xi32> to vector<2x1xi32>
    %89 = vector.broadcast %88 : vector<2x1xi32> to vector<2x128xi32>
    %c0_45 = arith.constant 0 : index
    %c0_46 = arith.constant 0 : index
    %c0_47 = arith.constant 0 : index
    %90 = vector.load %arg8[%c0_45, %c0_46, %c0_47] : memref<1x2x128xi32, #tpu.memory_space<vmem>>, vector<1x2x128xi32>
    %91 = vector.shape_cast %90 : vector<1x2x128xi32> to vector<2x128xi32>
    %92 = vector.shape_cast %89 : vector<2x128xi32> to vector<1x2x128xi32>
    tpu.vector_store %arg8[%c0_45, %c0_46, %c0_47], %92 {strides = array<i32>} : memref<1x2x128xi32, #tpu.memory_space<vmem>>, vector<1x2x128xi32>,
    %93 = vector.broadcast %82 : vector<2x1xi32> to vector<2x256xi32>
    %94 = arith.cmpi eq, %69, %93 : vector<2x256xi32>
    %95 = arith.extui %94 : vector<2x256xi1> to vector<2x256xi32>
    %96 = arith.sitofp %95 : vector<2x256xi32> to vector<2x256xf32>
    %c0_48 = arith.constant 0 : index
    %c0_49 = arith.constant 0 : index
    %97 = vector.load %arg7[%c0_48, %c0_49] : memref<256x128xf32, #tpu.memory_space<vmem>>, vector<256x128xf32>
    %cst_50 = arith.constant dense<0.000000e+00> : vector<2x128xf32>
    %98 = tpu.matmul %96, %97, %cst_50 {dimension_numbers = #tpu.dot_dimension_numbers<[1], [0], [0], [1], [0, 0, 1, 1], [], []>} : vector<2x256xf32>, vector<256x128xf32>, vector<2x128xf32> -> vector<2x128xf32>
    %c0_51 = arith.constant 0 : index
    %c0_52 = arith.constant 0 : index
    %99 = vector.load %arg11[%c0_51, %c0_52] : memref<2x128xf32, #tpu.memory_space<vmem>>, vector<2x128xf32>
    tpu.vector_store %arg11[%c0_51, %c0_52], %98 {strides = array<i32>} : memref<2x128xf32, #tpu.memory_space<vmem>>, vector<2x128xf32>,
    return
  }
  func.func @transform_0(%arg0: i32) -> (i32, i32, i32) {
    %c0_i32 = arith.constant 0 : i32
    %c0_i32_0 = arith.constant 0 : i32
    %c0_i32_1 = arith.constant 0 : i32
    %c0_i32_2 = arith.constant 0 : i32
    return %c0_i32, %c0_i32_0, %c0_i32_1 : i32, i32, i32
  }
  func.func @transform_1(%arg0: i32) -> (i32, i32) {
    %c0_i32 = arith.constant 0 : i32
    %c0_i32_0 = arith.constant 0 : i32
    %c0_i32_1 = arith.constant 0 : i32
    return %c0_i32, %c0_i32_0 : i32, i32
  }
  func.func @transform_2(%arg0: i32) -> (i32, i32, i32) {
    %c0_i32 = arith.constant 0 : i32
    %c0_i32_0 = arith.constant 0 : i32
    %c0_i32_1 = arith.constant 0 : i32
    %c0_i32_2 = arith.constant 0 : i32
    return %c0_i32, %c0_i32_0, %c0_i32_1 : i32, i32, i32
  }
  func.func @transform_3(%arg0: i32) -> (i32, i32, i32) {
    %c0_i32 = arith.constant 0 : i32
    %c0_i32_0 = arith.constant 0 : i32
    %c0_i32_1 = arith.constant 0 : i32
    %c0_i32_2 = arith.constant 0 : i32
    return %c0_i32, %c0_i32_0, %c0_i32_1 : i32, i32, i32
  }
  func.func @transform_4(%arg0: i32) -> (i32, i32) {
    %c0_i32 = arith.constant 0 : i32
    %c0_i32_0 = arith.constant 0 : i32
    %c0_i32_1 = arith.constant 0 : i32
    return %c0_i32, %c0_i32_0 : i32, i32
  }
  func.func @transform_5(%arg0: i32) -> (i32, i32) {
    %c0_i32 = arith.constant 0 : i32
    %c0_i32_0 = arith.constant 0 : i32
    %c0_i32_1 = arith.constant 0 : i32
    return %c0_i32, %c0_i32_0 : i32, i32
  }
  func.func @transform_6(%arg0: i32) -> (i32, i32) {
    %c0_i32 = arith.constant 0 : i32
    %c0_i32_0 = arith.constant 0 : i32
    %c0_i32_1 = arith.constant 0 : i32
    return %c0_i32, %c0_i32_0 : i32, i32
  }
  func.func @transform_7(%arg0: i32) -> (i32, i32, i32) {
    %c0_i32 = arith.constant 0 : i32
    %c0_i32_0 = arith.constant 0 : i32
    %c0_i32_1 = arith.constant 0 : i32
    return %arg0, %c0_i32, %c0_i32_0 : i32, i32, i32
  }
}

</mosaic_0001>

<llo_original>
// kernel: _generate.1
$region0: #{_generate.1}
  #allocation0 [shape = 'u32[]', space=smem, size = 0x4, offset = 0x4, fixed_abs, tag = 'smem constant byte address 0x4 - core index']
  #allocation1 [shape = 'u32[144,128]{1,0:T(1,128)}', space=vmem, size = 0x12000, scoped, tag = 'internal scratch']
  #allocation2 [shape = 'f32[2,10,128]{2,1,0:T(8,128)}', space=vmem, size = 0x4000, scoped, tag = 'scratch operand']
  #allocation3 [shape = 'f32[2,10,128]{2,1,0:T(8,128)}', space=vmem, size = 0x4000, scoped, tag = 'scratch operand']
  #allocation4 [shape = 'f32[2,128]{1,0:T(2,128)}', space=vmem, size = 0x400, scoped, tag = 'scratch operand']
  #allocation5 [shape = 's32[2,1]{1,0:T(2,128)}', space=vmem, size = 0x400, scoped, tag = 'scratch operand']
  %s0 = inlined_call_operand.vmem [shape: f32[2,10,128], index: 0, kind: input, shape index: {}]
  %s1 = inlined_call_operand.vmem [shape: f32[2,128], index: 1, kind: input, shape index: {}]
  %s2 = inlined_call_operand.vmem [shape: f32[2,8,128], index: 2, kind: input, shape index: {}]
  %s3 = inlined_call_operand.vmem [shape: f32[2,1,10], index: 3, kind: input, shape index: {}]
  %s4 = inlined_call_operand.hbm [shape: f32[128,384], index: 4, kind: input, shape index: {}]
  %s5 = inlined_call_operand.hbm [shape: f32[128,256], index: 5, kind: input, shape index: {}]
  %s6 = inlined_call_operand.hbm [shape: f32[256,128], index: 6, kind: input, shape index: {}]
  %s7 = inlined_call_operand.vmem [shape: s32[6,2,128], index: 7, kind: output, shape index: {}]
  %s8 = sld [smem:[#allocation0]]
  $region77: #{_generate.1} parent=0
    _
  %s10 = ssub.s32 1, %s8
  %s11 = scalar_select 0, %s10, %s8
  $region1: #{_generate.1} parent=0
    #allocation6 [shape = 'u8[196608]{0}', space=vmem, size = 0x30000, scoped, tag = 'input window, operand 4, single buffered']
    #allocation7 [shape = 's32[2]{0}', space=sflag, size = 0x8, scoped, tag = 'scoped memory for _generate.1']
    #allocation8 [shape = 'u8[131072]{0}', space=vmem, size = 0x20000, scoped, tag = 'input window, operand 5, single buffered']
    #allocation9 [shape = 's32[1]{0}', space=sflag, size = 0x4, scoped, tag = 'scoped memory for _generate.1']
    #allocation10 [shape = 'u8[131072]{0}', space=vmem, size = 0x20000, scoped, tag = 'input window, operand 6, single buffered']
    %12 = vsyncpa [#allocation7], 0
    %13 = vsyncpa [#allocation9], 0
    loop: start=0, step=1, limit=8
    $region2: #{_generate.1} parent=1 // loop_pre_header
      _
    $region3: #{_generate.1} parent=1 // loop_header
      %s15 = sphi 0, %s19
      %p16 = scmp.ge.s32.totalorder %s15, 8
      %s23 = sphi 0, %s23
      %s25 = sphi 0, %s23
      %s26 = sphi 0, %s25
      %s40 = sphi 0, %s26
      %s44 = sphi 0, %s44
      %s46 = sphi 0, %s44
      %s47 = sphi 0, %s46
      %s61 = sphi 0, %s47
      %s65 = sphi 0, %s65
      %s67 = sphi 0, %s65
      %s68 = sphi 0, %s67
      %s82 = sphi 0, %s68
      %s86 = sphi 0, %s86
      %s88 = sphi 0, %s86
      %s89 = sphi 0, %s88
      %s103 = sphi 0, %s89
      %s107 = sphi 0, %s107
      %s109 = sphi 0, %s107
      %s110 = sphi 0, %s109
      %s124 = sphi 0, %s110
      %s128 = sphi 0, %s128
      %s130 = sphi 0, %s128
      %s131 = sphi 0, %s130
      %s145 = sphi 0, %s131
      %s149 = sphi 0, %s149
      %s151 = sphi 0, %s149
      %s152 = sphi 0, %s151
      %s166 = sphi 0, %s152
      %s172 = sphi 0, %s174
      %s175 = sphi 0, %s172
      %s176 = sphi 0, %s175
      %s192 = sphi 0, %s176
    $region4: #{_generate.1} parent=1 // loop_header_branch
      %18 = sbr.rel (%p16) target = $region8
    $region5: #{_generate.1} parent=1 // loop_body
      %s20 = ssub.s32 %s15, 1
      %s21 = ssub.s32 %s15, 2
      %s22 = sadd.s32 %s15, 1
      %s24 = sadd.s32 %s23, 1
      %p27 = scmp.eq.s32.totalorder %s15, 5
      %p28 = scmp.ne.s32.totalorder %s23, %s25
      %p29 = scmp.eq.s32.totalorder %s15, 0
      %p30 = por %p28, %p29
      %p31 = scmp.ne.s32.totalorder %s23, %s25
      %p32 = scmp.eq.s32.totalorder %s20, 5
      %p33 = por %p31, %p32
      %p34 = scmp.ne.s32.totalorder %s25, %s26
      %p35 = scmp.eq.s32.totalorder %s20, 0
      %p36 = por %p34, %p35
      %p37 = scmp.ne.s32.totalorder %s25, %s26
      %p38 = scmp.eq.s32.totalorder %s21, 5
      %p39 = por %p37, %p38
      %p41 = scmp.ne.s32.totalorder %s26, %s40
      %p42 = scmp.eq.s32.totalorder %s21, 0
      %p43 = por %p41, %p42
      %s45 = sadd.s32 %s44, 1
      %p48 = scmp.eq.s32.totalorder %s15, 5
      %p49 = scmp.ne.s32.totalorder %s44, %s46
      %p50 = scmp.eq.s32.totalorder %s15, 0
      %p51 = por %p49, %p50
      %p52 = scmp.ne.s32.totalorder %s44, %s46
      %p53 = scmp.eq.s32.totalorder %s20, 5
      %p54 = por %p52, %p53
      %p55 = scmp.ne.s32.totalorder %s46, %s47
      %p56 = scmp.eq.s32.totalorder %s20, 0
      %p57 = por %p55, %p56
      %p58 = scmp.ne.s32.totalorder %s46, %s47
      %p59 = scmp.eq.s32.totalorder %s21, 5
      %p60 = por %p58, %p59
      %p62 = scmp.ne.s32.totalorder %s47, %s61
      %p63 = scmp.eq.s32.totalorder %s21, 0
      %p64 = por %p62, %p63
      %s66 = sadd.s32 %s65, 1
      %p69 = scmp.eq.s32.totalorder %s15, 5
      %p70 = scmp.ne.s32.totalorder %s65, %s67
      %p71 = scmp.eq.s32.totalorder %s15, 0
      %p72 = por %p70, %p71
      %p73 = scmp.ne.s32.totalorder %s65, %s67
      %p74 = scmp.eq.s32.totalorder %s20, 5
      %p75 = por %p73, %p74
      %p76 = scmp.ne.s32.totalorder %s67, %s68
      %p77 = scmp.eq.s32.totalorder %s20, 0
      %p78 = por %p76, %p77
      %p79 = scmp.ne.s32.totalorder %s67, %s68
      %p80 = scmp.eq.s32.totalorder %s21, 5
      %p81 = por %p79, %p80
      %p83 = scmp.ne.s32.totalorder %s68, %s82
      %p84 = scmp.eq.s32.totalorder %s21, 0
      %p85 = por %p83, %p84
      %s87 = sadd.s32 %s86, 1
      %p90 = scmp.eq.s32.totalorder %s15, 5
      %p91 = scmp.ne.s32.totalorder %s86, %s88
      %p92 = scmp.eq.s32.totalorder %s15, 0
      %p93 = por %p91, %p92
      %p94 = scmp.ne.s32.totalorder %s86, %s88
      %p95 = scmp.eq.s32.totalorder %s20, 5
      %p96 = por %p94, %p95
      %p97 = scmp.ne.s32.totalorder %s88, %s89
      %p98 = scmp.eq.s32.totalorder %s20, 0
      %p99 = por %p97, %p98
      %p100 = scmp.ne.s32.totalorder %s88, %s89
      %p101 = scmp.eq.s32.totalorder %s21, 5
      %p102 = por %p100, %p101
      %p104 = scmp.ne.s32.totalorder %s89, %s103
      %p105 = scmp.eq.s32.totalorder %s21, 0
      %p106 = por %p104, %p105
      %s108 = sadd.s32 %s107, 1
      %p111 = scmp.eq.s32.totalorder %s15, 5
      %p112 = scmp.ne.s32.totalorder %s107, %s109
      %p113 = scmp.eq.s32.totalorder %s15, 0
      %p114 = por %p112, %p113
      %p115 = scmp.ne.s32.totalorder %s107, %s109
      %p116 = scmp.eq.s32.totalorder %s20, 5
      %p117 = por %p115, %p116
      %p118 = scmp.ne.s32.totalorder %s109, %s110
      %p119 = scmp.eq.s32.totalorder %s20, 0
      %p120 = por %p118, %p119
      %p121 = scmp.ne.s32.totalorder %s109, %s110
      %p122 = scmp.eq.s32.totalorder %s21, 5
      %p123 = por %p121, %p122
      %p125 = scmp.ne.s32.totalorder %s110, %s124
      %p126 = scmp.eq.s32.totalorder %s21, 0
      %p127 = por %p125, %p126
      %s129 = sadd.s32 %s128, 1
      %p132 = scmp.eq.s32.totalorder %s15, 5
      %p133 = scmp.ne.s32.totalorder %s128, %s130
      %p134 = scmp.eq.s32.totalorder %s15, 0
      %p135 = por %p133, %p134
      %p136 = scmp.ne.s32.totalorder %s128, %s130
      %p137 = scmp.eq.s32.totalorder %s20, 5
      %p138 = por %p136, %p137
      %p139 = scmp.ne.s32.totalorder %s130, %s131
      %p140 = scmp.eq.s32.totalorder %s20, 0
      %p141 = por %p139, %p140
      %p142 = scmp.ne.s32.totalorder %s130, %s131
      %p143 = scmp.eq.s32.totalorder %s21, 5
      %p144 = por %p142, %p143
      %p146 = scmp.ne.s32.totalorder %s131, %s145
      %p147 = scmp.eq.s32.totalorder %s21, 0
      %p148 = por %p146, %p147
      %s150 = sadd.s32 %s149, 1
      %p153 = scmp.eq.s32.totalorder %s15, 5
      %p154 = scmp.ne.s32.totalorder %s149, %s151
      %p155 = scmp.eq.s32.totalorder %s15, 0
      %p156 = por %p154, %p155
      %p157 = scmp.ne.s32.totalorder %s149, %s151
      %p158 = scmp.eq.s32.totalorder %s20, 5
      %p159 = por %p157, %p158
      %p160 = scmp.ne.s32.totalorder %s151, %s152
      %p161 = scmp.eq.s32.totalorder %s20, 0
      %p162 = por %p160, %p161
      %p163 = scmp.ne.s32.totalorder %s151, %s152
      %p164 = scmp.eq.s32.totalorder %s21, 5
      %p165 = por %p163, %p164
      %p167 = scmp.ne.s32.totalorder %s152, %s166
      %p168 = scmp.eq.s32.totalorder %s21, 0
      %p169 = por %p167, %p168
      %s170 = ssub.s32 %s15, %s22
      %p171 = scmp.eq.s32.totalorder %s170, 0
      %s173 = sadd.s32 %s172, 1
      %s174 = scalar_select %p171, %s172, %s173
      %p177 = pneg %p171
      %p178 = scmp.eq.s32.totalorder %s15, 5
      %p179 = por %p177, %p178
      %p180 = scmp.ne.s32.totalorder %s172, %s175
      %p181 = scmp.eq.s32.totalorder %s15, 0
      %p182 = por %p180, %p181
      %p183 = scmp.ne.s32.totalorder %s172, %s175
      %p184 = scmp.eq.s32.totalorder %s20, 5
      %p185 = por %p183, %p184
      %p186 = scmp.ne.s32.totalorder %s175, %s176
      %p187 = scmp.eq.s32.totalorder %s20, 0
      %p188 = por %p186, %p187
      %p189 = scmp.ne.s32.totalorder %s175, %s176
      %p190 = scmp.eq.s32.totalorder %s21, 5
      %p191 = por %p189, %p190
      %p193 = scmp.ne.s32.totalorder %s176, %s192
      %p194 = scmp.eq.s32.totalorder %s21, 0
      %p195 = por %p193, %p194
      %p196 = scmp.le.s32.totalorder 1, %s15
      %p197 = scmp.lt.s32.totalorder %s15, 7
      %p198 = pnand %p196, %p197
      %p199 = pneg %p198
      // Predicated region
      $region9: #{_generate.1} parent=5 // pred_check
        _
      $region10: #{_generate.1} parent=5 // pred_check_branch
        %201 = sbr.rel (%p198) target = $region12
      $region11: #{_generate.1} parent=5 // pred_region
        %s202 = ssub.s32 %s15, 1
        // Predicated region
        $region13: #{_generate.1} parent=11 // pred_check
          %p203 = pneg %p36
        $region14: #{_generate.1} parent=11 // pred_check_branch
          %205 = sbr.rel (%p203) target = $region16
        $region15: #{_generate.1} parent=11 // pred_region
          _
        $region16: #{_generate.1} parent=11 // pred_fallthru
          _
        // Predicated region
        $region17: #{_generate.1} parent=11 // pred_check
          %p206 = pneg %p57
        $region18: #{_generate.1} parent=11 // pred_check_branch
          %208 = sbr.rel (%p206) target = $region20
        $region19: #{_generate.1} parent=11 // pred_region
          _
        $region20: #{_generate.1} parent=11 // pred_fallthru
          _
        // Predicated region
        $region21: #{_generate.1} parent=11 // pred_check
          %p209 = pneg %p78
        $region22: #{_generate.1} parent=11 // pred_check_branch
          %211 = sbr.rel (%p209) target = $region24
        $region23: #{_generate.1} parent=11 // pred_region
          _
        $region24: #{_generate.1} parent=11 // pred_fallthru
          _
        // Predicated region
        $region25: #{_generate.1} parent=11 // pred_check
          %p212 = pneg %p99
        $region26: #{_generate.1} parent=11 // pred_check_branch
          %214 = sbr.rel (%p212) target = $region28
        $region27: #{_generate.1} parent=11 // pred_region
          _
        $region28: #{_generate.1} parent=11 // pred_fallthru
          _
        // Predicated region
        $region29: #{_generate.1} parent=11 // pred_check
          %p215 = pneg %p120
        $region30: #{_generate.1} parent=11 // pred_check_branch
          %217 = sbr.rel (%p215) target = $region32
        $region31: #{_generate.1} parent=11 // pred_region
          %s219 = ssub.s32 6144, 6144
          %220 = vsyncadd [#allocation7], %s219
          %s221 = sshll.u32 [#allocation6], 4
          %s222 = int_to_ptr.vmem [resolvable:$true] %s221
          %227 = dma.hbm_to_vmem [thread:$0]  %s4, 6144, %s222, [#allocation7], 384, 384, 24
        $region32: #{_generate.1} parent=11 // pred_fallthru
          _
        // Predicated region
        $region33: #{_generate.1} parent=11 // pred_check
          %p228 = pneg %p141
        $region34: #{_generate.1} parent=11 // pred_check_branch
          %230 = sbr.rel (%p228) target = $region36
        $region35: #{_generate.1} parent=11 // pred_region
          %s232 = ssub.s32 4096, 4096
          %233 = vsyncadd [#allocation9], %s232
          %s234 = sshll.u32 [#allocation8], 4
          %s235 = int_to_ptr.vmem [resolvable:$true] %s234
          %240 = dma.hbm_to_vmem [thread:$0]  %s5, 4096, %s235, [#allocation9], 256, 256, 16
        $region36: #{_generate.1} parent=11 // pred_fallthru
          _
        // Predicated region
        $region37: #{_generate.1} parent=11 // pred_check
          %p241 = pneg %p162
        $region38: #{_generate.1} parent=11 // pred_check_branch
          %243 = sbr.rel (%p241) target = $region40
        $region39: #{_generate.1} parent=11 // pred_region
          %s245 = ssub.s32 4096, 4096
          %246 = vsyncadd [#allocation9], %s245
          %s247 = sshll.u32 [#allocation10], 4
          %s248 = int_to_ptr.vmem [resolvable:$true] %s247
          %253 = dma.hbm_to_vmem [thread:$0]  %s6, 4096, %s248, [#allocation9], 128, 128, 8
        $region40: #{_generate.1} parent=11 // pred_fallthru
          _
      $region12: #{_generate.1} parent=5 // pred_fallthru
        _
      %p254 = scmp.lt.s32.totalorder %s15, 6
      // Predicated region
      $region41: #{_generate.1} parent=5 // pred_check
        %p255 = pneg %p254
      $region42: #{_generate.1} parent=5 // pred_check_branch
        %257 = sbr.rel (%p255) target = $region44
      $region43: #{_generate.1} parent=5 // pred_region
        _
      $region44: #{_generate.1} parent=5 // pred_fallthru
        _
      %p258 = scmp.le.s32.totalorder 1, %s15
      %p259 = scmp.lt.s32.totalorder %s15, 7
      %p260 = pnand %p258, %p259
      %p261 = pneg %p260
      // Predicated region
      $region45: #{_generate.1} parent=5 // pred_check
        _
      $region46: #{_generate.1} parent=5 // pred_check_branch
        %263 = sbr.rel (%p260) target = $region48
      $region47: #{_generate.1} parent=5 // pred_region
        %s264 = ssub.s32 %s15, 1
        // Predicated region
        $region49: #{_generate.1} parent=47 // pred_check
          %p265 = pneg %p120
        $region50: #{_generate.1} parent=47 // pred_check_branch
          %267 = sbr.rel (%p265) target = $region52
        $region51: #{_generate.1} parent=47 // pred_region
          %268 = dma.done [#allocation7], 6144
        $region52: #{_generate.1} parent=47 // pred_fallthru
          _
        // Predicated region
        $region53: #{_generate.1} parent=47 // pred_check
          %p269 = pneg %p141
        $region54: #{_generate.1} parent=47 // pred_check_branch
          %271 = sbr.rel (%p269) target = $region56
        $region55: #{_generate.1} parent=47 // pred_region
          %272 = dma.done [#allocation9], 4096
        $region56: #{_generate.1} parent=47 // pred_fallthru
          _
        // Predicated region
        $region57: #{_generate.1} parent=47 // pred_check
          %p273 = pneg %p162
        $region58: #{_generate.1} parent=47 // pred_check_branch
          %275 = sbr.rel (%p273) target = $region60
        $region59: #{_generate.1} parent=47 // pred_region
          %276 = dma.done [#allocation9], 4096
        $region60: #{_generate.1} parent=47 // pred_fallthru
          _
        %p277 = pneg %p36
        %p278 = pneg %p33
        %p279 = pneg %p57
        %p280 = pneg %p54
        %p281 = pneg %p78
        %p282 = pneg %p75
        %p283 = pneg %p99
        %p284 = pneg %p96
        %p285 = pneg %p120
        %p286 = pneg %p117
        %p287 = pneg %p141
        %p288 = pneg %p138
        %p289 = pneg %p162
        %p290 = pneg %p159
        %p291 = pneg %p188
        %p292 = pneg %p185
        %p293 = scmp.lt.s32.totalorder %s20, 5
        %s294 = scalar_select %p293, %s20, 5
        %s295 = smul.addr %s294, 2
        %s296 = scalar_lea.vmem %s7, %s295
        %p297 = scmp.lt.s32.totalorder %s20, 5
        %s298 = scalar_select %p297, %s20, 5
        %s299 = smul.addr %s298, 2
        %s300 = scalar_lea.vmem %s7, %s299
        %s301 = sadd.s32 %s20, 3
        %p302 = scmp.eq.s32.totalorder %s20, 0
        // Predicated region
        $region61: #{_generate.1} parent=47 // pred_check
          %p303 = pneg %p302
        $region62: #{_generate.1} parent=47 // pred_check_branch
          %305 = sbr.rel (%p303) target = $region64
        $region63: #{_generate.1} parent=47 // pred_region
          %v306 = vld [vmem:[#allocation6 + $0x8] sm:$0xff]
          %v307 = vld [vmem:[#allocation6 + $0x10] sm:$0xff]
          %v308 = vld [vmem:[#allocation6 + $0x20] sm:$0xff]
          %v309 = vld [vmem:[#allocation6 + $0x28] sm:$0xff]
          %v310 = vld [vmem:[#allocation6 + $0x38] sm:$0xff]
          %v311 = vld [vmem:[#allocation6 + $0x40] sm:$0xff]
          %v312 = vld [vmem:[#allocation6 + $0x50] sm:$0xff]
          %v313 = vld [vmem:[#allocation6 + $0x58] sm:$0xff]
          %v314 = vld [vmem:[#allocation6 + $0x68] sm:$0xff]
          %v315 = vld [vmem:[#allocation6 + $0x70] sm:$0xff]
          %v316 = vld [vmem:[#allocation6 + $0x80] sm:$0xff]
          %v317 = vld [vmem:[#allocation6 + $0x88] sm:$0xff]
          %v318 = vld [vmem:[#allocation6 + $0x98] sm:$0xff]
          %v319 = vld [vmem:[#allocation6 + $0xa0] sm:$0xff]
          %v320 = vld [vmem:[#allocation6 + $0xb0] sm:$0xff]
          %v321 = vld [vmem:[#allocation6 + $0xb8] sm:$0xff]
          %v322 = vld [vmem:[#allocation6 + $0xc8] sm:$0xff]
          %v323 = vld [vmem:[#allocation6 + $0xd0] sm:$0xff]
          %v324 = vld [vmem:[#allocation6 + $0xe0] sm:$0xff]
          %v325 = vld [vmem:[#allocation6 + $0xe8] sm:$0xff]
          %v326 = vld [vmem:[#allocation6 + $0xf8] sm:$0xff]
          %v327 = vld [vmem:[#allocation6 + $0x100] sm:$0xff]
          %v328 = vld [vmem:[#allocation6 + $0x110] sm:$0xff]
          %v329 = vld [vmem:[#allocation6 + $0x118] sm:$0xff]
          %v330 = vld [vmem:[#allocation6 + $0x128] sm:$0xff]
          %v331 = vld [vmem:[#allocation6 + $0x130] sm:$0xff]
          %v332 = vld [vmem:[#allocation6 + $0x140] sm:$0xff]
          %v333 = vld [vmem:[#allocation6 + $0x148] sm:$0xff]
          %v334 = vld [vmem:[#allocation6 + $0x158] sm:$0xff]
          %v335 = vld [vmem:[#allocation6 + $0x160] sm:$0xff]
          %v336 = vld [vmem:[#allocation6 + $0x170] sm:$0xff]
          %v337 = vld [vmem:[#allocation6 + $0x178] sm:$0xff]
          %v338 = vld [vmem:[%s0] sm:$0xff]
          %v339 = vld [vmem:[%s0 + $0x8] sm:$0x3]
          %340 = vmatprep.subr.mxu0 %v337
          %341 = vmatpush1.msra.mxu0 %v336
          %342 = vmatprep.subr.mxu0 %v335
          %343 = vmatpush1.msra.mxu0 %v334
          %344 = vmatprep.subr.mxu0 %v333
          %345 = vmatpush1.msra.mxu0 %v332
          %346 = vmatprep.subr.mxu0 %v331
          %347 = vmatpush1.msra.mxu0 %v330
          %348 = vmatprep.subr.mxu0 %v329
          %349 = vmatpush1.msra.mxu0 %v328
          %350 = vmatprep.subr.mxu0 %v327
          %351 = vmatpush1.msra.mxu0 %v326
          %352 = vmatprep.subr.mxu0 %v325
          %353 = vmatpush1.msra.mxu0 %v324
          %354 = vmatprep.subr.mxu0 %v323
          %355 = vmatpush1.msra.mxu0 %v322
          %356 = vmatprep.subr.mxu0 %v321
          %357 = vmatpush1.msra.mxu0 %v320
          %358 = vmatprep.subr.mxu0 %v319
          %359 = vmatpush1.msra.mxu0 %v318
          %360 = vmatprep.subr.mxu0 %v317
          %361 = vmatpush1.msra.mxu0 %v316
          %362 = vmatprep.subr.mxu0 %v315
          %363 = vmatpush1.msra.mxu0 %v314
          %364 = vmatprep.subr.mxu0 %v313
          %365 = vmatpush1.msra.mxu0 %v312
          %366 = vmatprep.subr.mxu0 %v311
          %367 = vmatpush1.msra.mxu0 %v310
          %368 = vmatprep.subr.mxu0 %v309
          %369 = vmatpush1.msra.mxu0 %v308
          %370 = vmatprep.subr.mxu0 %v307
          %371 = vmatpush1.msra.mxu0 %v306
          %372 = vmatprep.subr.mxu0 0.0
          %373 = vmatpush2.msra.mxu0 0.0
          %374 = vmatprep.subr.mxu0 0.0
          %375 = vmatpush2.msra.mxu0 0.0
          %376 = vmatprep.subr.mxu0 0.0
          %377 = vmatpush2.msra.mxu0 0.0
          %378 = vmatprep.subr.mxu0 0.0
          %379 = vmatpush2.msra.mxu0 0.0
          %380 = vmatprep.subr.mxu0 0.0
          %381 = vmatpush2.msra.mxu0 0.0
          %382 = vmatprep.subr.mxu0 0.0
          %383 = vmatpush2.msra.mxu0 0.0
          %384 = vmatprep.subr.mxu0 0.0
          %385 = vmatpush2.msra.mxu0 0.0
          %386 = vmatprep.subr.mxu0 0.0
          %387 = vmatpush2.msra.mxu0 0.0
          %388 = vmatprep.subr.mxu0 0.0
          %389 = vmatpush2.msra.mxu0 0.0
          %390 = vmatprep.subr.mxu0 0.0
          %391 = vmatpush2.msra.mxu0 0.0
          %392 = vmatprep.subr.mxu0 0.0
          %393 = vmatpush2.msra.mxu0 0.0
          %394 = vmatprep.subr.mxu0 0.0
          %395 = vmatpush2.msra.mxu0 0.0
          %396 = vmatprep.subr.mxu0 0.0
          %397 = vmatpush2.msra.mxu0 0.0
          %398 = vmatprep.subr.mxu0 0.0
          %399 = vmatpush2.msra.mxu0 0.0
          %400 = vmatprep.subr.mxu0 0.0
          %401 = vmatpush2.msra.mxu0 0.0
          %402 = vmatprep.subr.mxu0 0.0
          %403 = vmatpush2.msra.mxu0 0.0
          %404 = vmatprep.mubr.f32.mxu0 0.0
          %405 = vmatmul.mubr.f32.gmra.mxu0 %v338
          %v406 = vpop.f32.mrf.mxu0
          %v407 = vadd.f32 0.0, %v406
          %v408 = vpop.f32.mrf.mxu0
          %v409 = vadd.f32 0.0, %v408
          %410 = vmatprep.mubr.f32.mxu0 0.0
          %411 = vmatmul.mubr.f32.gmra.mxu0 %v339
          %v412 = vpop.f32.mrf.mxu0
          %v413 = vadd.f32 0.0, %v412
          %v414 = vpop.f32.mrf.mxu0
          %v415 = vadd.f32 0.0, %v414
          %416 = vdwg.mxu0
          %417 = vst [vmem:[#allocation2] sm:$0xff] %v407
          %418 = vst [vmem:[#allocation2 + $0x8] sm:$0x3] %v413
          %419 = vst [vmem:[#allocation3] sm:$0xff] %v409
          %420 = vst [vmem:[#allocation3 + $0x8] sm:$0x3] %v415
          %s421 = scalar_lea.vmem %s0, 16
          %v422 = vld [vmem:[%s421] sm:$0xff]
          %v423 = vld [vmem:[%s421 + $0x8] sm:$0x3]
          %424 = vmatprep.subr.mxu0 %v337
          %425 = vmatpush1.msra.mxu0 %v336
          %426 = vmatprep.subr.mxu0 %v335
          %427 = vmatpush1.msra.mxu0 %v334
          %428 = vmatprep.subr.mxu0 %v333
          %429 = vmatpush1.msra.mxu0 %v332
          %430 = vmatprep.subr.mxu0 %v331
          %431 = vmatpush1.msra.mxu0 %v330
          %432 = vmatprep.subr.mxu0 %v329
          %433 = vmatpush1.msra.mxu0 %v328
          %434 = vmatprep.subr.mxu0 %v327
          %435 = vmatpush1.msra.mxu0 %v326
          %436 = vmatprep.subr.mxu0 %v325
          %437 = vmatpush1.msra.mxu0 %v324
          %438 = vmatprep.subr.mxu0 %v323
          %439 = vmatpush1.msra.mxu0 %v322
          %440 = vmatprep.subr.mxu0 %v321
          %441 = vmatpush1.msra.mxu0 %v320
          %442 = vmatprep.subr.mxu0 %v319
          %443 = vmatpush1.msra.mxu0 %v318
          %444 = vmatprep.subr.mxu0 %v317
          %445 = vmatpush1.msra.mxu0 %v316
          %446 = vmatprep.subr.mxu0 %v315
          %447 = vmatpush1.msra.mxu0 %v314
          %448 = vmatprep.subr.mxu0 %v313
          %449 = vmatpush1.msra.mxu0 %v312
          %450 = vmatprep.subr.mxu0 %v311
          %451 = vmatpush1.msra.mxu0 %v310
          %452 = vmatprep.subr.mxu0 %v309
          %453 = vmatpush1.msra.mxu0 %v308
          %454 = vmatprep.subr.mxu0 %v307
          %455 = vmatpush1.msra.mxu0 %v306
          %456 = vmatprep.subr.mxu0 0.0
          %457 = vmatpush2.msra.mxu0 0.0
          %458 = vmatprep.subr.mxu0 0.0
          %459 = vmatpush2.msra.mxu0 0.0
          %460 = vmatprep.subr.mxu0 0.0
          %461 = vmatpush2.msra.mxu0 0.0
          %462 = vmatprep.subr.mxu0 0.0
          %463 = vmatpush2.msra.mxu0 0.0
          %464 = vmatprep.subr.mxu0 0.0
          %465 = vmatpush2.msra.mxu0 0.0
          %466 = vmatprep.subr.mxu0 0.0
          %467 = vmatpush2.msra.mxu0 0.0
          %468 = vmatprep.subr.mxu0 0.0
          %469 = vmatpush2.msra.mxu0 0.0
          %470 = vmatprep.subr.mxu0 0.0
          %471 = vmatpush2.msra.mxu0 0.0
          %472 = vmatprep.subr.mxu0 0.0
          %473 = vmatpush2.msra.mxu0 0.0
          %474 = vmatprep.subr.mxu0 0.0
          %475 = vmatpush2.msra.mxu0 0.0
          %476 = vmatprep.subr.mxu0 0.0
          %477 = vmatpush2.msra.mxu0 0.0
          %478 = vmatprep.subr.mxu0 0.0
          %479 = vmatpush2.msra.mxu0 0.0
          %480 = vmatprep.subr.mxu0 0.0
          %481 = vmatpush2.msra.mxu0 0.0
          %482 = vmatprep.subr.mxu0 0.0
          %483 = vmatpush2.msra.mxu0 0.0
          %484 = vmatprep.subr.mxu0 0.0
          %485 = vmatpush2.msra.mxu0 0.0
          %486 = vmatprep.subr.mxu0 0.0
          %487 = vmatpush2.msra.mxu0 0.0
          %488 = vmatprep.mubr.f32.mxu0 0.0
          %489 = vmatmul.mubr.f32.gmra.mxu0 %v422
          %v490 = vpop.f32.mrf.mxu0
          %v491 = vadd.f32 0.0, %v490
          %v492 = vpop.f32.mrf.mxu0
          %v493 = vadd.f32 0.0, %v492
          %494 = vmatprep.mubr.f32.mxu0 0.0
          %495 = vmatmul.mubr.f32.gmra.mxu0 %v423
          %v496 = vpop.f32.mrf.mxu0
          %v497 = vadd.f32 0.0, %v496
          %v498 = vpop.f32.mrf.mxu0
          %v499 = vadd.f32 0.0, %v498
          %500 = vdwg.mxu0
          %s501 = scalar_lea.vmem [#allocation2], 16
          %502 = vst [vmem:[%s501] sm:$0xff] %v491
          %503 = vst [vmem:[%s501 + $0x8] sm:$0x3] %v497
          %s504 = scalar_lea.vmem [#allocation3], 16
          %505 = vst [vmem:[%s504] sm:$0xff] %v493
          %506 = vst [vmem:[%s504 + $0x8] sm:$0x3] %v499
          %v507 = vld [vmem:[%s1] sm:$0x3]
          %508 = vst [vmem:[#allocation4] sm:$0x3] %v507
          %vm509 = vcmask 1024
          %510 = vst.msk [vmem:[#allocation5] sm:$0x3] %vm509, 1
        $region64: #{_generate.1} parent=47 // pred_fallthru
          _
        %v511 = vld [vmem:[#allocation4] sm:$0x3]
        %v512 = vld [vmem:[#allocation6] sm:$0xff]
        %v513 = vld [vmem:[#allocation6 + $0x8] sm:$0xff]
        %v514 = vld [vmem:[#allocation6 + $0x10] sm:$0xff]
        %v515 = vld [vmem:[#allocation6 + $0x18] sm:$0xff]
        %v516 = vld [vmem:[#allocation6 + $0x20] sm:$0xff]
        %v517 = vld [vmem:[#allocation6 + $0x28] sm:$0xff]
        %v518 = vld [vmem:[#allocation6 + $0x30] sm:$0xff]
        %v519 = vld [vmem:[#allocation6 + $0x38] sm:$0xff]
        %v520 = vld [vmem:[#allocation6 + $0x40] sm:$0xff]
        %v521 = vld [vmem:[#allocation6 + $0x48] sm:$0xff]
        %v522 = vld [vmem:[#allocation6 + $0x50] sm:$0xff]
        %v523 = vld [vmem:[#allocation6 + $0x58] sm:$0xff]
        %v524 = vld [vmem:[#allocation6 + $0x60] sm:$0xff]
        %v525 = vld [vmem:[#allocation6 + $0x68] sm:$0xff]
        %v526 = vld [vmem:[#allocation6 + $0x70] sm:$0xff]
        %v527 = vld [vmem:[#allocation6 + $0x78] sm:$0xff]
        %v528 = vld [vmem:[#allocation6 + $0x80] sm:$0xff]
        %v529 = vld [vmem:[#allocation6 + $0x88] sm:$0xff]
        %v530 = vld [vmem:[#allocation6 + $0x90] sm:$0xff]
        %v531 = vld [vmem:[#allocation6 + $0x98] sm:$0xff]
        %v532 = vld [vmem:[#allocation6 + $0xa0] sm:$0xff]
        %v533 = vld [vmem:[#allocation6 + $0xa8] sm:$0xff]
        %v534 = vld [vmem:[#allocation6 + $0xb0] sm:$0xff]
        %v535 = vld [vmem:[#allocation6 + $0xb8] sm:$0xff]
        %v536 = vld [vmem:[#allocation6 + $0xc0] sm:$0xff]
        %v537 = vld [vmem:[#allocation6 + $0xc8] sm:$0xff]
        %v538 = vld [vmem:[#allocation6 + $0xd0] sm:$0xff]
        %v539 = vld [vmem:[#allocation6 + $0xd8] sm:$0xff]
        %v540 = vld [vmem:[#allocation6 + $0xe0] sm:$0xff]
        %v541 = vld [vmem:[#allocation6 + $0xe8] sm:$0xff]
        %v542 = vld [vmem:[#allocation6 + $0xf0] sm:$0xff]
        %v543 = vld [vmem:[#allocation6 + $0xf8] sm:$0xff]
        %v544 = vld [vmem:[#allocation6 + $0x100] sm:$0xff]
        %v545 = vld [vmem:[#allocation6 + $0x108] sm:$0xff]
        %v546 = vld [vmem:[#allocation6 + $0x110] sm:$0xff]
        %v547 = vld [vmem:[#allocation6 + $0x118] sm:$0xff]
        %v548 = vld [vmem:[#allocation6 + $0x120] sm:$0xff]
        %v549 = vld [vmem:[#allocation6 + $0x128] sm:$0xff]
        %v550 = vld [vmem:[#allocation6 + $0x130] sm:$0xff]
        %v551 = vld [vmem:[#allocation6 + $0x138] sm:$0xff]
        %v552 = vld [vmem:[#allocation6 + $0x140] sm:$0xff]
        %v553 = vld [vmem:[#allocation6 + $0x148] sm:$0xff]
        %v554 = vld [vmem:[#allocation6 + $0x150] sm:$0xff]
        %v555 = vld [vmem:[#allocation6 + $0x158] sm:$0xff]
        %v556 = vld [vmem:[#allocation6 + $0x160] sm:$0xff]
        %v557 = vld [vmem:[#allocation6 + $0x168] sm:$0xff]
        %v558 = vld [vmem:[#allocation6 + $0x170] sm:$0xff]
        %v559 = vld [vmem:[#allocation6 + $0x178] sm:$0xff]
        %560 = vmatprep.subr.mxu0 %v558
        %561 = vmatpush1.msra.mxu0 %v557
        %562 = vmatprep.subr.mxu0 %v555
        %563 = vmatpush1.msra.mxu0 %v554
        %564 = vmatprep.subr.mxu0 %v552
        %565 = vmatpush1.msra.mxu0 %v551
        %566 = vmatprep.subr.mxu0 %v549
        %567 = vmatpush1.msra.mxu0 %v548
        %568 = vmatprep.subr.mxu0 %v546
        %569 = vmatpush1.msra.mxu0 %v545
        %570 = vmatprep.subr.mxu0 %v543
        %571 = vmatpush1.msra.mxu0 %v542
        %572 = vmatprep.subr.mxu0 %v540
        %573 = vmatpush1.msra.mxu0 %v539
        %574 = vmatprep.subr.mxu0 %v537
        %575 = vmatpush1.msra.mxu0 %v536
        %576 = vmatprep.subr.mxu0 %v534
        %577 = vmatpush1.msra.mxu0 %v533
        %578 = vmatprep.subr.mxu0 %v531
        %579 = vmatpush1.msra.mxu0 %v530
        %580 = vmatprep.subr.mxu0 %v528
        %581 = vmatpush1.msra.mxu0 %v527
        %582 = vmatprep.subr.mxu0 %v525
        %583 = vmatpush1.msra.mxu0 %v524
        %584 = vmatprep.subr.mxu0 %v522
        %585 = vmatpush1.msra.mxu0 %v521
        %586 = vmatprep.subr.mxu0 %v519
        %587 = vmatpush1.msra.mxu0 %v518
        %588 = vmatprep.subr.mxu0 %v516
        %589 = vmatpush1.msra.mxu0 %v515
        %590 = vmatprep.subr.mxu0 %v513
        %591 = vmatpush1.msra.mxu0 %v512
        %592 = vmatprep.subr.mxu0 0.0
        %593 = vmatpush2.msra.mxu0 0.0
        %594 = vmatprep.subr.mxu0 0.0
        %595 = vmatpush2.msra.mxu0 0.0
        %596 = vmatprep.subr.mxu0 0.0
        %597 = vmatpush2.msra.mxu0 0.0
        %598 = vmatprep.subr.mxu0 0.0
        %599 = vmatpush2.msra.mxu0 0.0
        %600 = vmatprep.subr.mxu0 0.0
        %601 = vmatpush2.msra.mxu0 0.0
        %602 = vmatprep.subr.mxu0 0.0
        %603 = vmatpush2.msra.mxu0 0.0
        %604 = vmatprep.subr.mxu0 0.0
        %605 = vmatpush2.msra.mxu0 0.0
        %606 = vmatprep.subr.mxu0 0.0
        %607 = vmatpush2.msra.mxu0 0.0
        %608 = vmatprep.subr.mxu0 0.0
        %609 = vmatpush2.msra.mxu0 0.0
        %610 = vmatprep.subr.mxu0 0.0
        %611 = vmatpush2.msra.mxu0 0.0
        %612 = vmatprep.subr.mxu0 0.0
        %613 = vmatpush2.msra.mxu0 0.0
        %614 = vmatprep.subr.mxu0 0.0
        %615 = vmatpush2.msra.mxu0 0.0
        %616 = vmatprep.subr.mxu0 0.0
        %617 = vmatpush2.msra.mxu0 0.0
        %618 = vmatprep.subr.mxu0 0.0
        %619 = vmatpush2.msra.mxu0 0.0
        %620 = vmatprep.subr.mxu0 0.0
        %621 = vmatpush2.msra.mxu0 0.0
        %622 = vmatprep.subr.mxu0 0.0
        %623 = vmatpush2.msra.mxu0 0.0
        %624 = vmatprep.mubr.f32.mxu0 0.0
        %625 = vmatmul.mubr.f32.gmra.mxu0 %v511
        %v626 = vpop.f32.mrf.mxu0
        %v627 = vadd.f32 0.0, %v626
        %v628 = vpop.f32.mrf.mxu0
        %v629 = vadd.f32 0.0, %v628
        %630 = vdwg.mxu0
        %631 = vmatprep.subr.mxu0 0.0
        %632 = vmatpush1.msra.mxu0 %v559
        %633 = vmatprep.subr.mxu0 0.0
        %634 = vmatpush1.msra.mxu0 %v556
        %635 = vmatprep.subr.mxu0 0.0
        %636 = vmatpush1.msra.mxu0 %v553
        %637 = vmatprep.subr.mxu0 0.0
        %638 = vmatpush1.msra.mxu0 %v550
        %639 = vmatprep.subr.mxu0 0.0
        %640 = vmatpush1.msra.mxu0 %v547
        %641 = vmatprep.subr.mxu0 0.0
        %642 = vmatpush1.msra.mxu0 %v544
        %643 = vmatprep.subr.mxu0 0.0
        %644 = vmatpush1.msra.mxu0 %v541
        %645 = vmatprep.subr.mxu0 0.0
        %646 = vmatpush1.msra.mxu0 %v538
        %647 = vmatprep.subr.mxu0 0.0
        %648 = vmatpush1.msra.mxu0 %v535
        %649 = vmatprep.subr.mxu0 0.0
        %650 = vmatpush1.msra.mxu0 %v532
        %651 = vmatprep.subr.mxu0 0.0
        %652 = vmatpush1.msra.mxu0 %v529
        %653 = vmatprep.subr.mxu0 0.0
        %654 = vmatpush1.msra.mxu0 %v526
        %655 = vmatprep.subr.mxu0 0.0
        %656 = vmatpush1.msra.mxu0 %v523
        %657 = vmatprep.subr.mxu0 0.0
        %658 = vmatpush1.msra.mxu0 %v520
        %659 = vmatprep.subr.mxu0 0.0
        %660 = vmatpush1.msra.mxu0 %v517
        %661 = vmatprep.subr.mxu0 0.0
        %662 = vmatpush1.msra.mxu0 %v514
        %663 = vmatprep.subr.mxu0 0.0
        %664 = vmatpush2.msra.mxu0 0.0
        %665 = vmatprep.subr.mxu0 0.0
        %666 = vmatpush2.msra.mxu0 0.0
        %667 = vmatprep.subr.mxu0 0.0
        %668 = vmatpush2.msra.mxu0 0.0
        %669 = vmatprep.subr.mxu0 0.0
        %670 = vmatpush2.msra.mxu0 0.0
        %671 = vmatprep.subr.mxu0 0.0
        %672 = vmatpush2.msra.mxu0 0.0
        %673 = vmatprep.subr.mxu0 0.0
        %674 = vmatpush2.msra.mxu0 0.0
        %675 = vmatprep.subr.mxu0 0.0
        %676 = vmatpush2.msra.mxu0 0.0
        %677 = vmatprep.subr.mxu0 0.0
        %678 = vmatpush2.msra.mxu0 0.0
        %679 = vmatprep.subr.mxu0 0.0
        %680 = vmatpush2.msra.mxu0 0.0
        %681 = vmatprep.subr.mxu0 0.0
        %682 = vmatpush2.msra.mxu0 0.0
        %683 = vmatprep.subr.mxu0 0.0
        %684 = vmatpush2.msra.mxu0 0.0
        %685 = vmatprep.subr.mxu0 0.0
        %686 = vmatpush2.msra.mxu0 0.0
        %687 = vmatprep.subr.mxu0 0.0
        %688 = vmatpush2.msra.mxu0 0.0
        %689 = vmatprep.subr.mxu0 0.0
        %690 = vmatpush2.msra.mxu0 0.0
        %691 = vmatprep.subr.mxu0 0.0
        %692 = vmatpush2.msra.mxu0 0.0
        %693 = vmatprep.subr.mxu0 0.0
        %694 = vmatpush2.msra.mxu0 0.0
        %695 = vmatprep.mubr.f32.mxu0 0.0
        %696 = vmatmul.mubr.f32.gmra.mxu0 %v511
        %v697 = vpop.f32.mrf.mxu0
        %v698 = vadd.f32 0.0, %v697
        %v699 = vpop.f32.mrf.mxu0
        %700 = vdwg.mxu0
        %v701 = vlaneseq
        %v702 = vshrl.u32 %v701, 7
        %v703 = vadd.s32 %v702, 8
        %v704 = vstv %s301
        %vm705 = vcmp.eq.s32.totalorder %v702, %v704
        %vm706 = vcmp.eq.s32.totalorder %v703, %v704
        %v709 = vunpack.c.l.s4 1966171168
        %v710 = vunpack.c.0.s8 %v709
        %v711 = vlaneseq
        %v712 = vshrl.u32 %v711, 7
        %v713 = vsub.s32 %v710, %v712
        %v714 = vrot.slane %v629, %v713
        %v715 = vcombine.high %v714, %v714
        %v717 = vunpack.c.l.s4 1966171168
        %v718 = vunpack.c.0.s8 %v717
        %v719 = vlaneseq
        %v720 = vshrl.u32 %v719, 7
        %v721 = vsub.s32 %v718, %v720
        %v722 = vrot.slane %v714, %v721
        %v724 = vunpack.c.l.s4 1966171168
        %v725 = vunpack.c.0.s8 %v724
        %v726 = vlaneseq
        %v727 = vshrl.u32 %v726, 7
        %v728 = vsub.s32 %v725, %v727
        %v729 = vrot.slane %v715, %v728
        %v730 = vld [vmem:[#allocation2] sm:$0xff]
        %v731 = vld [vmem:[#allocation2 + $0x8] sm:$0x3]
        %v732 = vld [vmem:[#allocation2 + $0x10] sm:$0xff]
        %v733 = vld [vmem:[#allocation2 + $0x18] sm:$0x3]
        %v734 = vlaneseq
        %v735 = vshrl.u32 %v734, 7
        %v736 = vsub.s32 0, %v735
        %v737 = vrot.slane %v722, %v736
        %v738 = vlaneseq
        %v739 = vshrl.u32 %v738, 7
        %v740 = vsub.s32 0, %v739
        %v741 = vrot.slane %v729, %v740
        %v744 = vsel %vm705, %v737, %v730
        %v745 = vsel %vm706, %v737, %v731
        %v746 = vsel %vm705, %v741, %v732
        %v747 = vsel %vm706, %v741, %v733
        %v750 = vunpack.c.l.s4 1966171168
        %v751 = vunpack.c.0.s8 %v750
        %v752 = vlaneseq
        %v753 = vshrl.u32 %v752, 7
        %v754 = vsub.s32 %v751, %v753
        %v755 = vrot.slane %v698, %v754
        %v756 = vcombine.high %v755, %v755
        %v758 = vunpack.c.l.s4 1966171168
        %v759 = vunpack.c.0.s8 %v758
        %v760 = vlaneseq
        %v761 = vshrl.u32 %v760, 7
        %v762 = vsub.s32 %v759, %v761
        %v763 = vrot.slane %v755, %v762
        %v765 = vunpack.c.l.s4 1966171168
        %v766 = vunpack.c.0.s8 %v765
        %v767 = vlaneseq
        %v768 = vshrl.u32 %v767, 7
        %v769 = vsub.s32 %v766, %v768
        %v770 = vrot.slane %v756, %v769
        %v771 = vld [vmem:[#allocation3] sm:$0xff]
        %v772 = vld [vmem:[#allocation3 + $0x8] sm:$0x3]
        %v773 = vld [vmem:[#allocation3 + $0x10] sm:$0xff]
        %v774 = vld [vmem:[#allocation3 + $0x18] sm:$0x3]
        %v775 = vlaneseq
        %v776 = vshrl.u32 %v775, 7
        %v777 = vsub.s32 0, %v776
        %v778 = vrot.slane %v763, %v777
        %v779 = vlaneseq
        %v780 = vshrl.u32 %v779, 7
        %v781 = vsub.s32 0, %v780
        %v782 = vrot.slane %v770, %v781
        %v785 = vsel %vm705, %v778, %v771
        %v786 = vsel %vm706, %v778, %v772
        %v787 = vsel %vm705, %v782, %v773
        %v788 = vsel %vm706, %v782, %v774
        %789 = vst [vmem:[#allocation2] sm:$0xff] %v744
        %790 = vst [vmem:[#allocation2 + $0x8] sm:$0x3] %v745
        %791 = vst [vmem:[#allocation2 + $0x10] sm:$0xff] %v746
        %792 = vst [vmem:[#allocation2 + $0x18] sm:$0x3] %v747
        %793 = vst [vmem:[#allocation3] sm:$0xff] %v785
        %794 = vst [vmem:[#allocation3 + $0x8] sm:$0x3] %v786
        %795 = vst [vmem:[#allocation3 + $0x10] sm:$0xff] %v787
        %796 = vst [vmem:[#allocation3 + $0x18] sm:$0x3] %v788
        %v797 = vmul.f32 %v627, 0.088388346
        %v800 = vunpack.c.l.s4 1966171168
        %v801 = vunpack.c.0.s8 %v800
        %v802 = vlaneseq
        %v803 = vshrl.u32 %v802, 7
        %v804 = vsub.s32 %v801, %v803
        %v805 = vrot.slane %v797, %v804
        %v806 = vcombine.high %v805, %v805
        %v808 = vunpack.c.l.s4 1966171168
        %v809 = vunpack.c.0.s8 %v808
        %v810 = vlaneseq
        %v811 = vshrl.u32 %v810, 7
        %v812 = vsub.s32 %v809, %v811
        %v813 = vrot.slane %v805, %v812
        %v815 = vunpack.c.l.s4 1966171168
        %v816 = vunpack.c.0.s8 %v815
        %v817 = vlaneseq
        %v818 = vshrl.u32 %v817, 7
        %v819 = vsub.s32 %v816, %v818
        %v820 = vrot.slane %v806, %v819
        %v823 = vld [vmem:[%s3] sm:$0x1]
        %v824 = vld [vmem:[%s3 + $0x1] sm:$0x1]
        %825 = vmatprep.subr.mxu0 0.0
        %826 = vmatpush1.xpose.msra.mxu0 0.0
        %827 = vmatprep.subr.mxu0 0.0
        %828 = vmatpush1.xpose.msra.mxu0 0.0
        %829 = vmatprep.subr.mxu0 0.0
        %830 = vmatpush1.xpose.msra.mxu0 0.0
        %831 = vmatprep.subr.mxu0 0.0
        %832 = vmatpush1.xpose.msra.mxu0 0.0
        %833 = vmatprep.subr.mxu0 0.0
        %834 = vmatpush1.xpose.msra.mxu0 0.0
        %835 = vmatprep.subr.mxu0 0.0
        %836 = vmatpush1.xpose.msra.mxu0 0.0
        %837 = vmatprep.subr.mxu0 0.0
        %838 = vmatpush1.xpose.msra.mxu0 0.0
        %839 = vmatprep.subr.mxu0 0.0
        %840 = vmatpush1.xpose.msra.mxu0 0.0
        %841 = vmatprep.subr.mxu0 0.0
        %842 = vmatpush1.xpose.msra.mxu0 0.0
        %843 = vmatprep.subr.mxu0 0.0
        %844 = vmatpush1.xpose.msra.mxu0 0.0
        %845 = vmatprep.subr.mxu0 0.0
        %846 = vmatpush1.xpose.msra.mxu0 0.0
        %847 = vmatprep.subr.mxu0 0.0
        %848 = vmatpush1.xpose.msra.mxu0 0.0
        %849 = vmatprep.subr.mxu0 0.0
        %850 = vmatpush1.xpose.msra.mxu0 0.0
        %851 = vmatprep.subr.mxu0 0.0
        %852 = vmatpush1.xpose.msra.mxu0 0.0
        %853 = vmatprep.subr.mxu0 0.0
        %854 = vmatpush1.xpose.msra.mxu0 %v745
        %855 = vmatprep.subr.mxu0 0.0
        %856 = vmatpush1.xpose.msra.mxu0 %v744
        %857 = vmatprep.subr.mxu0 0.0
        %858 = vmatpush2.xpose.msra.mxu0 0.0
        %859 = vmatprep.subr.mxu0 0.0
        %860 = vmatpush2.xpose.msra.mxu0 0.0
        %861 = vmatprep.subr.mxu0 0.0
        %862 = vmatpush2.xpose.msra.mxu0 0.0
        %863 = vmatprep.subr.mxu0 0.0
        %864 = vmatpush2.xpose.msra.mxu0 0.0
        %865 = vmatprep.subr.mxu0 0.0
        %866 = vmatpush2.xpose.msra.mxu0 0.0
        %867 = vmatprep.subr.mxu0 0.0
        %868 = vmatpush2.xpose.msra.mxu0 0.0
        %869 = vmatprep.subr.mxu0 0.0
        %870 = vmatpush2.xpose.msra.mxu0 0.0
        %871 = vmatprep.subr.mxu0 0.0
        %872 = vmatpush2.xpose.msra.mxu0 0.0
        %873 = vmatprep.subr.mxu0 0.0
        %874 = vmatpush2.xpose.msra.mxu0 0.0
        %875 = vmatprep.subr.mxu0 0.0
        %876 = vmatpush2.xpose.msra.mxu0 0.0
        %877 = vmatprep.subr.mxu0 0.0
        %878 = vmatpush2.xpose.msra.mxu0 0.0
        %879 = vmatprep.subr.mxu0 0.0
        %880 = vmatpush2.xpose.msra.mxu0 0.0
        %881 = vmatprep.subr.mxu0 0.0
        %882 = vmatpush2.xpose.msra.mxu0 0.0
        %883 = vmatprep.subr.mxu0 0.0
        %884 = vmatpush2.xpose.msra.mxu0 0.0
        %885 = vmatprep.subr.mxu0 0.0
        %886 = vmatpush2.xpose.msra.mxu0 0.0
        %887 = vmatprep.subr.mxu0 0.0
        %888 = vmatpush2.xpose.msra.mxu0 0.0
        %889 = vmatprep.mubr.f32.mxu0 0.0
        %890 = vmatmul.mubr.f32.gmra.mxu0 %v813
        %v891 = vpop.f32.mrf.mxu0
        %v892 = vadd.f32 %v823, %v891
        %v893 = vpop.f32.mrf.mxu0
        %894 = vdwg.mxu0
        %895 = vmatprep.subr.mxu0 0.0
        %896 = vmatpush1.xpose.msra.mxu0 0.0
        %897 = vmatprep.subr.mxu0 0.0
        %898 = vmatpush1.xpose.msra.mxu0 0.0
        %899 = vmatprep.subr.mxu0 0.0
        %900 = vmatpush1.xpose.msra.mxu0 0.0
        %901 = vmatprep.subr.mxu0 0.0
        %902 = vmatpush1.xpose.msra.mxu0 0.0
        %903 = vmatprep.subr.mxu0 0.0
        %904 = vmatpush1.xpose.msra.mxu0 0.0
        %905 = vmatprep.subr.mxu0 0.0
        %906 = vmatpush1.xpose.msra.mxu0 0.0
        %907 = vmatprep.subr.mxu0 0.0
        %908 = vmatpush1.xpose.msra.mxu0 0.0
        %909 = vmatprep.subr.mxu0 0.0
        %910 = vmatpush1.xpose.msra.mxu0 0.0
        %911 = vmatprep.subr.mxu0 0.0
        %912 = vmatpush1.xpose.msra.mxu0 0.0
        %913 = vmatprep.subr.mxu0 0.0
        %914 = vmatpush1.xpose.msra.mxu0 0.0
        %915 = vmatprep.subr.mxu0 0.0
        %916 = vmatpush1.xpose.msra.mxu0 0.0
        %917 = vmatprep.subr.mxu0 0.0
        %918 = vmatpush1.xpose.msra.mxu0 0.0
        %919 = vmatprep.subr.mxu0 0.0
        %920 = vmatpush1.xpose.msra.mxu0 0.0
        %921 = vmatprep.subr.mxu0 0.0
        %922 = vmatpush1.xpose.msra.mxu0 0.0
        %923 = vmatprep.subr.mxu0 0.0
        %924 = vmatpush1.xpose.msra.mxu0 %v747
        %925 = vmatprep.subr.mxu0 0.0
        %926 = vmatpush1.xpose.msra.mxu0 %v746
        %927 = vmatprep.subr.mxu0 0.0
        %928 = vmatpush2.xpose.msra.mxu0 0.0
        %929 = vmatprep.subr.mxu0 0.0
        %930 = vmatpush2.xpose.msra.mxu0 0.0
        %931 = vmatprep.subr.mxu0 0.0
        %932 = vmatpush2.xpose.msra.mxu0 0.0
        %933 = vmatprep.subr.mxu0 0.0
        %934 = vmatpush2.xpose.msra.mxu0 0.0
        %935 = vmatprep.subr.mxu0 0.0
        %936 = vmatpush2.xpose.msra.mxu0 0.0
        %937 = vmatprep.subr.mxu0 0.0
        %938 = vmatpush2.xpose.msra.mxu0 0.0
        %939 = vmatprep.subr.mxu0 0.0
        %940 = vmatpush2.xpose.msra.mxu0 0.0
        %941 = vmatprep.subr.mxu0 0.0
        %942 = vmatpush2.xpose.msra.mxu0 0.0
        %943 = vmatprep.subr.mxu0 0.0
        %944 = vmatpush2.xpose.msra.mxu0 0.0
        %945 = vmatprep.subr.mxu0 0.0
        %946 = vmatpush2.xpose.msra.mxu0 0.0
        %947 = vmatprep.subr.mxu0 0.0
        %948 = vmatpush2.xpose.msra.mxu0 0.0
        %949 = vmatprep.subr.mxu0 0.0
        %950 = vmatpush2.xpose.msra.mxu0 0.0
        %951 = vmatprep.subr.mxu0 0.0
        %952 = vmatpush2.xpose.msra.mxu0 0.0
        %953 = vmatprep.subr.mxu0 0.0
        %954 = vmatpush2.xpose.msra.mxu0 0.0
        %955 = vmatprep.subr.mxu0 0.0
        %956 = vmatpush2.xpose.msra.mxu0 0.0
        %957 = vmatprep.subr.mxu0 0.0
        %958 = vmatpush2.xpose.msra.mxu0 0.0
        %959 = vmatprep.mubr.f32.mxu0 0.0
        %960 = vmatmul.mubr.f32.gmra.mxu0 %v820
        %v961 = vpop.f32.mrf.mxu0
        %v962 = vadd.f32 %v824, %v961
        %v963 = vpop.f32.mrf.mxu0
        %964 = vdwg.mxu0
        %v965 = vlaneseq
        %v966 = vand.u32 %v965, 127
        %vm967 = vcmp.le.s32.totalorder %v966, %v704
        %v968 = vsel %vm967, %v892, -1e+30
        %v969 = vsel %vm967, %v962, -1e+30
        %vm970 = vcmask 73728
        %v971 = vsel %vm970, %v968, -inf
        %972 = vmax.xlane.f32.xlu0 %v971
        %v973 = vpop.xlane.xlu0 %972
        %v974 = vsel %vm970, %v969, -inf
        %975 = vmax.xlane.f32.xlu0 %v974
        %v976 = vpop.xlane.xlu0 %975
        %v977 = vsub.f32 %v968, %v973
        %v978 = vsub.f32 %v969, %v976
        %v979 = vmul.f32 %v977, 1.442695
        %v980 = vpow.pop %v979
        %v981 = vmul.f32 %v978, 1.442695
        %v982 = vpow.pop %v981
        %v983 = vsel %vm970, %v980, 0.0
        %984 = vadd.xlane.f32.xlu0 %v983
        %v985 = vpop.xlane.xlu0 %984
        %v986 = vsel %vm970, %v982, 0.0
        %987 = vadd.xlane.f32.xlu0 %v986
        %v988 = vpop.xlane.xlu0 %987
        %v989 = vrcp.pop %v985
        %v990 = vrcp.pop %v988
        %vm991 = vcmask 80896
        %v993 = vsel %vm991, %v980, 0
        %vm995 = vcmask 1041408
        %v997 = vsel %vm995, %v786, 0
        %999 = vmatprep.subr.mxu0 0.0
        %1000 = vmatpush1.msra.mxu0 0.0
        %1001 = vmatprep.subr.mxu0 0.0
        %1002 = vmatpush1.msra.mxu0 0.0
        %1003 = vmatprep.subr.mxu0 0.0
        %1004 = vmatpush1.msra.mxu0 0.0
        %1005 = vmatprep.subr.mxu0 0.0
        %1006 = vmatpush1.msra.mxu0 0.0
        %1007 = vmatprep.subr.mxu0 0.0
        %1008 = vmatpush1.msra.mxu0 0.0
        %1009 = vmatprep.subr.mxu0 0.0
        %1010 = vmatpush1.msra.mxu0 0.0
        %1011 = vmatprep.subr.mxu0 0.0
        %1012 = vmatpush1.msra.mxu0 0.0
        %1013 = vmatprep.subr.mxu0 0.0
        %1014 = vmatpush1.msra.mxu0 0.0
        %1015 = vmatprep.subr.mxu0 0.0
        %1016 = vmatpush1.msra.mxu0 0.0
        %1017 = vmatprep.subr.mxu0 0.0
        %1018 = vmatpush1.msra.mxu0 0.0
        %1019 = vmatprep.subr.mxu0 0.0
        %1020 = vmatpush1.msra.mxu0 0.0
        %1021 = vmatprep.subr.mxu0 0.0
        %1022 = vmatpush1.msra.mxu0 0.0
        %1023 = vmatprep.subr.mxu0 0.0
        %1024 = vmatpush1.msra.mxu0 0.0
        %1025 = vmatprep.subr.mxu0 0.0
        %1026 = vmatpush1.msra.mxu0 0.0
        %1027 = vmatprep.subr.mxu0 0.0
        %1028 = vmatpush1.msra.mxu0 %v997
        %1029 = vmatprep.subr.mxu0 0.0
        %1030 = vmatpush1.msra.mxu0 %v785
        %1031 = vmatprep.subr.mxu0 0.0
        %1032 = vmatpush2.msra.mxu0 0.0
        %1033 = vmatprep.subr.mxu0 0.0
        %1034 = vmatpush2.msra.mxu0 0.0
        %1035 = vmatprep.subr.mxu0 0.0
        %1036 = vmatpush2.msra.mxu0 0.0
        %1037 = vmatprep.subr.mxu0 0.0
        %1038 = vmatpush2.msra.mxu0 0.0
        %1039 = vmatprep.subr.mxu0 0.0
        %1040 = vmatpush2.msra.mxu0 0.0
        %1041 = vmatprep.subr.mxu0 0.0
        %1042 = vmatpush2.msra.mxu0 0.0
        %1043 = vmatprep.subr.mxu0 0.0
        %1044 = vmatpush2.msra.mxu0 0.0
        %1045 = vmatprep.subr.mxu0 0.0
        %1046 = vmatpush2.msra.mxu0 0.0
        %1047 = vmatprep.subr.mxu0 0.0
        %1048 = vmatpush2.msra.mxu0 0.0
        %1049 = vmatprep.subr.mxu0 0.0
        %1050 = vmatpush2.msra.mxu0 0.0
        %1051 = vmatprep.subr.mxu0 0.0
        %1052 = vmatpush2.msra.mxu0 0.0
        %1053 = vmatprep.subr.mxu0 0.0
        %1054 = vmatpush2.msra.mxu0 0.0
        %1055 = vmatprep.subr.mxu0 0.0
        %1056 = vmatpush2.msra.mxu0 0.0
        %1057 = vmatprep.subr.mxu0 0.0
        %1058 = vmatpush2.msra.mxu0 0.0
        %1059 = vmatprep.subr.mxu0 0.0
        %1060 = vmatpush2.msra.mxu0 0.0
        %1061 = vmatprep.subr.mxu0 0.0
        %1062 = vmatpush2.msra.mxu0 0.0
        %1063 = vmatprep.mubr.f32.mxu0 0.0
        %1064 = vmatmul.mubr.f32.gmra.mxu0 %v993
        %v1065 = vpop.f32.mrf.mxu0
        %v1066 = vadd.f32 0.0, %v1065
        %v1067 = vpop.f32.mrf.mxu0
        %1068 = vdwg.mxu0
        %v1070 = vsel %vm991, %v982, 0
        %v1073 = vsel %vm995, %v788, 0
        %1075 = vmatprep.subr.mxu0 0.0
        %1076 = vmatpush1.msra.mxu0 0.0
        %1077 = vmatprep.subr.mxu0 0.0
        %1078 = vmatpush1.msra.mxu0 0.0
        %1079 = vmatprep.subr.mxu0 0.0
        %1080 = vmatpush1.msra.mxu0 0.0
        %1081 = vmatprep.subr.mxu0 0.0
        %1082 = vmatpush1.msra.mxu0 0.0
        %1083 = vmatprep.subr.mxu0 0.0
        %1084 = vmatpush1.msra.mxu0 0.0
        %1085 = vmatprep.subr.mxu0 0.0
        %1086 = vmatpush1.msra.mxu0 0.0
        %1087 = vmatprep.subr.mxu0 0.0
        %1088 = vmatpush1.msra.mxu0 0.0
        %1089 = vmatprep.subr.mxu0 0.0
        %1090 = vmatpush1.msra.mxu0 0.0
        %1091 = vmatprep.subr.mxu0 0.0
        %1092 = vmatpush1.msra.mxu0 0.0
        %1093 = vmatprep.subr.mxu0 0.0
        %1094 = vmatpush1.msra.mxu0 0.0
        %1095 = vmatprep.subr.mxu0 0.0
        %1096 = vmatpush1.msra.mxu0 0.0
        %1097 = vmatprep.subr.mxu0 0.0
        %1098 = vmatpush1.msra.mxu0 0.0
        %1099 = vmatprep.subr.mxu0 0.0
        %1100 = vmatpush1.msra.mxu0 0.0
        %1101 = vmatprep.subr.mxu0 0.0
        %1102 = vmatpush1.msra.mxu0 0.0
        %1103 = vmatprep.subr.mxu0 0.0
        %1104 = vmatpush1.msra.mxu0 %v1073
        %1105 = vmatprep.subr.mxu0 0.0
        %1106 = vmatpush1.msra.mxu0 %v787
        %1107 = vmatprep.subr.mxu0 0.0
        %1108 = vmatpush2.msra.mxu0 0.0
        %1109 = vmatprep.subr.mxu0 0.0
        %1110 = vmatpush2.msra.mxu0 0.0
        %1111 = vmatprep.subr.mxu0 0.0
        %1112 = vmatpush2.msra.mxu0 0.0
        %1113 = vmatprep.subr.mxu0 0.0
        %1114 = vmatpush2.msra.mxu0 0.0
        %1115 = vmatprep.subr.mxu0 0.0
        %1116 = vmatpush2.msra.mxu0 0.0
        %1117 = vmatprep.subr.mxu0 0.0
        %1118 = vmatpush2.msra.mxu0 0.0
        %1119 = vmatprep.subr.mxu0 0.0
        %1120 = vmatpush2.msra.mxu0 0.0
        %1121 = vmatprep.subr.mxu0 0.0
        %1122 = vmatpush2.msra.mxu0 0.0
        %1123 = vmatprep.subr.mxu0 0.0
        %1124 = vmatpush2.msra.mxu0 0.0
        %1125 = vmatprep.subr.mxu0 0.0
        %1126 = vmatpush2.msra.mxu0 0.0
        %1127 = vmatprep.subr.mxu0 0.0
        %1128 = vmatpush2.msra.mxu0 0.0
        %1129 = vmatprep.subr.mxu0 0.0
        %1130 = vmatpush2.msra.mxu0 0.0
        %1131 = vmatprep.subr.mxu0 0.0
        %1132 = vmatpush2.msra.mxu0 0.0
        %1133 = vmatprep.subr.mxu0 0.0
        %1134 = vmatpush2.msra.mxu0 0.0
        %1135 = vmatprep.subr.mxu0 0.0
        %1136 = vmatpush2.msra.mxu0 0.0
        %1137 = vmatprep.subr.mxu0 0.0
        %1138 = vmatpush2.msra.mxu0 0.0
        %1139 = vmatprep.mubr.f32.mxu0 0.0
        %1140 = vmatmul.mubr.f32.gmra.mxu0 %v1070
        %v1141 = vpop.f32.mrf.mxu0
        %v1142 = vadd.f32 0.0, %v1141
        %v1143 = vpop.f32.mrf.mxu0
        %1144 = vdwg.mxu0
        %v1145 = vmul.f32 %v1066, %v989
        %v1146 = vmul.f32 %v1142, %v990
        %v1147 = vld [vmem:[%s2] sm:$0xff]
        %v1148 = vld [vmem:[%s2 + $0x8] sm:$0xff]
        %1149 = vmatprep.subr.mxu0 0.0
        %1150 = vmatpush1.xpose.msra.mxu0 0.0
        %1151 = vmatprep.subr.mxu0 0.0
        %1152 = vmatpush1.xpose.msra.mxu0 0.0
        %1153 = vmatprep.subr.mxu0 0.0
        %1154 = vmatpush1.xpose.msra.mxu0 0.0
        %1155 = vmatprep.subr.mxu0 0.0
        %1156 = vmatpush1.xpose.msra.mxu0 0.0
        %1157 = vmatprep.subr.mxu0 0.0
        %1158 = vmatpush1.xpose.msra.mxu0 0.0
        %1159 = vmatprep.subr.mxu0 0.0
        %1160 = vmatpush1.xpose.msra.mxu0 0.0
        %1161 = vmatprep.subr.mxu0 0.0
        %1162 = vmatpush1.xpose.msra.mxu0 0.0
        %1163 = vmatprep.subr.mxu0 0.0
        %1164 = vmatpush1.xpose.msra.mxu0 0.0
        %1165 = vmatprep.subr.mxu0 0.0
        %1166 = vmatpush1.xpose.msra.mxu0 0.0
        %1167 = vmatprep.subr.mxu0 0.0
        %1168 = vmatpush1.xpose.msra.mxu0 0.0
        %1169 = vmatprep.subr.mxu0 0.0
        %1170 = vmatpush1.xpose.msra.mxu0 0.0
        %1171 = vmatprep.subr.mxu0 0.0
        %1172 = vmatpush1.xpose.msra.mxu0 0.0
        %1173 = vmatprep.subr.mxu0 0.0
        %1174 = vmatpush1.xpose.msra.mxu0 0.0
        %1175 = vmatprep.subr.mxu0 0.0
        %1176 = vmatpush1.xpose.msra.mxu0 0.0
        %1177 = vmatprep.subr.mxu0 0.0
        %1178 = vmatpush1.xpose.msra.mxu0 0.0
        %1179 = vmatprep.subr.mxu0 0.0
        %1180 = vmatpush1.xpose.msra.mxu0 %v1147
        %1181 = vmatprep.subr.mxu0 0.0
        %1182 = vmatpush2.xpose.msra.mxu0 0.0
        %1183 = vmatprep.subr.mxu0 0.0
        %1184 = vmatpush2.xpose.msra.mxu0 0.0
        %1185 = vmatprep.subr.mxu0 0.0
        %1186 = vmatpush2.xpose.msra.mxu0 0.0
        %1187 = vmatprep.subr.mxu0 0.0
        %1188 = vmatpush2.xpose.msra.mxu0 0.0
        %1189 = vmatprep.subr.mxu0 0.0
        %1190 = vmatpush2.xpose.msra.mxu0 0.0
        %1191 = vmatprep.subr.mxu0 0.0
        %1192 = vmatpush2.xpose.msra.mxu0 0.0
        %1193 = vmatprep.subr.mxu0 0.0
        %1194 = vmatpush2.xpose.msra.mxu0 0.0
        %1195 = vmatprep.subr.mxu0 0.0
        %1196 = vmatpush2.xpose.msra.mxu0 0.0
        %1197 = vmatprep.subr.mxu0 0.0
        %1198 = vmatpush2.xpose.msra.mxu0 0.0
        %1199 = vmatprep.subr.mxu0 0.0
        %1200 = vmatpush2.xpose.msra.mxu0 0.0
        %1201 = vmatprep.subr.mxu0 0.0
        %1202 = vmatpush2.xpose.msra.mxu0 0.0
        %1203 = vmatprep.subr.mxu0 0.0
        %1204 = vmatpush2.xpose.msra.mxu0 0.0
        %1205 = vmatprep.subr.mxu0 0.0
        %1206 = vmatpush2.xpose.msra.mxu0 0.0
        %1207 = vmatprep.subr.mxu0 0.0
        %1208 = vmatpush2.xpose.msra.mxu0 0.0
        %1209 = vmatprep.subr.mxu0 0.0
        %1210 = vmatpush2.xpose.msra.mxu0 0.0
        %1211 = vmatprep.subr.mxu0 0.0
        %1212 = vmatpush2.xpose.msra.mxu0 0.0
        %1213 = vmatprep.mubr.f32.mxu0 0.0
        %1214 = vmatmul.mubr.f32.gmra.mxu0 %v813
        %v1215 = vpop.f32.mrf.mxu0
        %v1216 = vadd.f32 0.0, %v1215
        %v1217 = vpop.f32.mrf.mxu0
        %1218 = vdwg.mxu0
        %1219 = vmatprep.subr.mxu0 0.0
        %1220 = vmatpush1.xpose.msra.mxu0 0.0
        %1221 = vmatprep.subr.mxu0 0.0
        %1222 = vmatpush1.xpose.msra.mxu0 0.0
        %1223 = vmatprep.subr.mxu0 0.0
        %1224 = vmatpush1.xpose.msra.mxu0 0.0
        %1225 = vmatprep.subr.mxu0 0.0
        %1226 = vmatpush1.xpose.msra.mxu0 0.0
        %1227 = vmatprep.subr.mxu0 0.0
        %1228 = vmatpush1.xpose.msra.mxu0 0.0
        %1229 = vmatprep.subr.mxu0 0.0
        %1230 = vmatpush1.xpose.msra.mxu0 0.0
        %1231 = vmatprep.subr.mxu0 0.0
        %1232 = vmatpush1.xpose.msra.mxu0 0.0
        %1233 = vmatprep.subr.mxu0 0.0
        %1234 = vmatpush1.xpose.msra.mxu0 0.0
        %1235 = vmatprep.subr.mxu0 0.0
        %1236 = vmatpush1.xpose.msra.mxu0 0.0
        %1237 = vmatprep.subr.mxu0 0.0
        %1238 = vmatpush1.xpose.msra.mxu0 0.0
        %1239 = vmatprep.subr.mxu0 0.0
        %1240 = vmatpush1.xpose.msra.mxu0 0.0
        %1241 = vmatprep.subr.mxu0 0.0
        %1242 = vmatpush1.xpose.msra.mxu0 0.0
        %1243 = vmatprep.subr.mxu0 0.0
        %1244 = vmatpush1.xpose.msra.mxu0 0.0
        %1245 = vmatprep.subr.mxu0 0.0
        %1246 = vmatpush1.xpose.msra.mxu0 0.0
        %1247 = vmatprep.subr.mxu0 0.0
        %1248 = vmatpush1.xpose.msra.mxu0 0.0
        %1249 = vmatprep.subr.mxu0 0.0
        %1250 = vmatpush1.xpose.msra.mxu0 %v1148
        %1251 = vmatprep.subr.mxu0 0.0
        %1252 = vmatpush2.xpose.msra.mxu0 0.0
        %1253 = vmatprep.subr.mxu0 0.0
        %1254 = vmatpush2.xpose.msra.mxu0 0.0
        %1255 = vmatprep.subr.mxu0 0.0
        %1256 = vmatpush2.xpose.msra.mxu0 0.0
        %1257 = vmatprep.subr.mxu0 0.0
        %1258 = vmatpush2.xpose.msra.mxu0 0.0
        %1259 = vmatprep.subr.mxu0 0.0
        %1260 = vmatpush2.xpose.msra.mxu0 0.0
        %1261 = vmatprep.subr.mxu0 0.0
        %1262 = vmatpush2.xpose.msra.mxu0 0.0
        %1263 = vmatprep.subr.mxu0 0.0
        %1264 = vmatpush2.xpose.msra.mxu0 0.0
        %1265 = vmatprep.subr.mxu0 0.0
        %1266 = vmatpush2.xpose.msra.mxu0 0.0
        %1267 = vmatprep.subr.mxu0 0.0
        %1268 = vmatpush2.xpose.msra.mxu0 0.0
        %1269 = vmatprep.subr.mxu0 0.0
        %1270 = vmatpush2.xpose.msra.mxu0 0.0
        %1271 = vmatprep.subr.mxu0 0.0
        %1272 = vmatpush2.xpose.msra.mxu0 0.0
        %1273 = vmatprep.subr.mxu0 0.0
        %1274 = vmatpush2.xpose.msra.mxu0 0.0
        %1275 = vmatprep.subr.mxu0 0.0
        %1276 = vmatpush2.xpose.msra.mxu0 0.0
        %1277 = vmatprep.subr.mxu0 0.0
        %1278 = vmatpush2.xpose.msra.mxu0 0.0
        %1279 = vmatprep.subr.mxu0 0.0
        %1280 = vmatpush2.xpose.msra.mxu0 0.0
        %1281 = vmatprep.subr.mxu0 0.0
        %1282 = vmatpush2.xpose.msra.mxu0 0.0
        %1283 = vmatprep.mubr.f32.mxu0 0.0
        %1284 = vmatmul.mubr.f32.gmra.mxu0 %v820
        %v1285 = vpop.f32.mrf.mxu0
        %v1286 = vadd.f32 0.0, %v1285
        %v1287 = vpop.f32.mrf.mxu0
        %1288 = vdwg.mxu0
        %vm1289 = vcmask 57344
        %v1290 = vsel %vm1289, %v1216, -inf
        %1291 = vmax.xlane.f32.xlu0 %v1290
        %v1292 = vpop.xlane.xlu0 %1291
        %v1293 = vsel %vm1289, %v1286, -inf
        %1294 = vmax.xlane.f32.xlu0 %v1293
        %v1295 = vpop.xlane.xlu0 %1294
        %v1296 = vsub.f32 %v1216, %v1292
        %v1297 = vsub.f32 %v1286, %v1295
        %v1298 = vmul.f32 %v1296, 1.442695
        %v1299 = vpow.pop %v1298
        %v1300 = vmul.f32 %v1297, 1.442695
        %v1301 = vpow.pop %v1300
        %v1302 = vsel %vm1289, %v1299, 0.0
        %1303 = vadd.xlane.f32.xlu0 %v1302
        %v1304 = vpop.xlane.xlu0 %1303
        %v1305 = vsel %vm1289, %v1301, 0.0
        %1306 = vadd.xlane.f32.xlu0 %v1305
        %v1307 = vpop.xlane.xlu0 %1306
        %v1308 = vrcp.pop %v1304
        %v1309 = vrcp.pop %v1307
        %vm1310 = vcmask 64512
        %v1312 = vsel %vm1310, %v1299, 0
        %1314 = vmatprep.subr.mxu0 0.0
        %1315 = vmatpush1.msra.mxu0 0.0
        %1316 = vmatprep.subr.mxu0 0.0
        %1317 = vmatpush1.msra.mxu0 0.0
        %1318 = vmatprep.subr.mxu0 0.0
        %1319 = vmatpush1.msra.mxu0 0.0
        %1320 = vmatprep.subr.mxu0 0.0
        %1321 = vmatpush1.msra.mxu0 0.0
        %1322 = vmatprep.subr.mxu0 0.0
        %1323 = vmatpush1.msra.mxu0 0.0
        %1324 = vmatprep.subr.mxu0 0.0
        %1325 = vmatpush1.msra.mxu0 0.0
        %1326 = vmatprep.subr.mxu0 0.0
        %1327 = vmatpush1.msra.mxu0 0.0
        %1328 = vmatprep.subr.mxu0 0.0
        %1329 = vmatpush1.msra.mxu0 0.0
        %1330 = vmatprep.subr.mxu0 0.0
        %1331 = vmatpush1.msra.mxu0 0.0
        %1332 = vmatprep.subr.mxu0 0.0
        %1333 = vmatpush1.msra.mxu0 0.0
        %1334 = vmatprep.subr.mxu0 0.0
        %1335 = vmatpush1.msra.mxu0 0.0
        %1336 = vmatprep.subr.mxu0 0.0
        %1337 = vmatpush1.msra.mxu0 0.0
        %1338 = vmatprep.subr.mxu0 0.0
        %1339 = vmatpush1.msra.mxu0 0.0
        %1340 = vmatprep.subr.mxu0 0.0
        %1341 = vmatpush1.msra.mxu0 0.0
        %1342 = vmatprep.subr.mxu0 0.0
        %1343 = vmatpush1.msra.mxu0 0.0
        %1344 = vmatprep.subr.mxu0 0.0
        %1345 = vmatpush1.msra.mxu0 %v1147
        %1346 = vmatprep.subr.mxu0 0.0
        %1347 = vmatpush2.msra.mxu0 0.0
        %1348 = vmatprep.subr.mxu0 0.0
        %1349 = vmatpush2.msra.mxu0 0.0
        %1350 = vmatprep.subr.mxu0 0.0
        %1351 = vmatpush2.msra.mxu0 0.0
        %1352 = vmatprep.subr.mxu0 0.0
        %1353 = vmatpush2.msra.mxu0 0.0
        %1354 = vmatprep.subr.mxu0 0.0
        %1355 = vmatpush2.msra.mxu0 0.0
        %1356 = vmatprep.subr.mxu0 0.0
        %1357 = vmatpush2.msra.mxu0 0.0
        %1358 = vmatprep.subr.mxu0 0.0
        %1359 = vmatpush2.msra.mxu0 0.0
        %1360 = vmatprep.subr.mxu0 0.0
        %1361 = vmatpush2.msra.mxu0 0.0
        %1362 = vmatprep.subr.mxu0 0.0
        %1363 = vmatpush2.msra.mxu0 0.0
        %1364 = vmatprep.subr.mxu0 0.0
        %1365 = vmatpush2.msra.mxu0 0.0
        %1366 = vmatprep.subr.mxu0 0.0
        %1367 = vmatpush2.msra.mxu0 0.0
        %1368 = vmatprep.subr.mxu0 0.0
        %1369 = vmatpush2.msra.mxu0 0.0
        %1370 = vmatprep.subr.mxu0 0.0
        %1371 = vmatpush2.msra.mxu0 0.0
        %1372 = vmatprep.subr.mxu0 0.0
        %1373 = vmatpush2.msra.mxu0 0.0
        %1374 = vmatprep.subr.mxu0 0.0
        %1375 = vmatpush2.msra.mxu0 0.0
        %1376 = vmatprep.subr.mxu0 0.0
        %1377 = vmatpush2.msra.mxu0 0.0
        %1378 = vmatprep.mubr.f32.mxu0 0.0
        %1379 = vmatmul.mubr.f32.gmra.mxu0 %v1312
        %v1380 = vpop.f32.mrf.mxu0
        %v1381 = vadd.f32 0.0, %v1380
        %v1382 = vpop.f32.mrf.mxu0
        %1383 = vdwg.mxu0
        %v1385 = vsel %vm1310, %v1301, 0
        %1387 = vmatprep.subr.mxu0 0.0
        %1388 = vmatpush1.msra.mxu0 0.0
        %1389 = vmatprep.subr.mxu0 0.0
        %1390 = vmatpush1.msra.mxu0 0.0
        %1391 = vmatprep.subr.mxu0 0.0
        %1392 = vmatpush1.msra.mxu0 0.0
        %1393 = vmatprep.subr.mxu0 0.0
        %1394 = vmatpush1.msra.mxu0 0.0
        %1395 = vmatprep.subr.mxu0 0.0
        %1396 = vmatpush1.msra.mxu0 0.0
        %1397 = vmatprep.subr.mxu0 0.0
        %1398 = vmatpush1.msra.mxu0 0.0
        %1399 = vmatprep.subr.mxu0 0.0
        %1400 = vmatpush1.msra.mxu0 0.0
        %1401 = vmatprep.subr.mxu0 0.0
        %1402 = vmatpush1.msra.mxu0 0.0
        %1403 = vmatprep.subr.mxu0 0.0
        %1404 = vmatpush1.msra.mxu0 0.0
        %1405 = vmatprep.subr.mxu0 0.0
        %1406 = vmatpush1.msra.mxu0 0.0
        %1407 = vmatprep.subr.mxu0 0.0
        %1408 = vmatpush1.msra.mxu0 0.0
        %1409 = vmatprep.subr.mxu0 0.0
        %1410 = vmatpush1.msra.mxu0 0.0
        %1411 = vmatprep.subr.mxu0 0.0
        %1412 = vmatpush1.msra.mxu0 0.0
        %1413 = vmatprep.subr.mxu0 0.0
        %1414 = vmatpush1.msra.mxu0 0.0
        %1415 = vmatprep.subr.mxu0 0.0
        %1416 = vmatpush1.msra.mxu0 0.0
        %1417 = vmatprep.subr.mxu0 0.0
        %1418 = vmatpush1.msra.mxu0 %v1148
        %1419 = vmatprep.subr.mxu0 0.0
        %1420 = vmatpush2.msra.mxu0 0.0
        %1421 = vmatprep.subr.mxu0 0.0
        %1422 = vmatpush2.msra.mxu0 0.0
        %1423 = vmatprep.subr.mxu0 0.0
        %1424 = vmatpush2.msra.mxu0 0.0
        %1425 = vmatprep.subr.mxu0 0.0
        %1426 = vmatpush2.msra.mxu0 0.0
        %1427 = vmatprep.subr.mxu0 0.0
        %1428 = vmatpush2.msra.mxu0 0.0
        %1429 = vmatprep.subr.mxu0 0.0
        %1430 = vmatpush2.msra.mxu0 0.0
        %1431 = vmatprep.subr.mxu0 0.0
        %1432 = vmatpush2.msra.mxu0 0.0
        %1433 = vmatprep.subr.mxu0 0.0
        %1434 = vmatpush2.msra.mxu0 0.0
        %1435 = vmatprep.subr.mxu0 0.0
        %1436 = vmatpush2.msra.mxu0 0.0
        %1437 = vmatprep.subr.mxu0 0.0
        %1438 = vmatpush2.msra.mxu0 0.0
        %1439 = vmatprep.subr.mxu0 0.0
        %1440 = vmatpush2.msra.mxu0 0.0
        %1441 = vmatprep.subr.mxu0 0.0
        %1442 = vmatpush2.msra.mxu0 0.0
        %1443 = vmatprep.subr.mxu0 0.0
        %1444 = vmatpush2.msra.mxu0 0.0
        %1445 = vmatprep.subr.mxu0 0.0
        %1446 = vmatpush2.msra.mxu0 0.0
        %1447 = vmatprep.subr.mxu0 0.0
        %1448 = vmatpush2.msra.mxu0 0.0
        %1449 = vmatprep.subr.mxu0 0.0
        %1450 = vmatpush2.msra.mxu0 0.0
        %1451 = vmatprep.mubr.f32.mxu0 0.0
        %1452 = vmatmul.mubr.f32.gmra.mxu0 %v1385
        %v1453 = vpop.f32.mrf.mxu0
        %v1454 = vadd.f32 0.0, %v1453
        %v1455 = vpop.f32.mrf.mxu0
        %1456 = vdwg.mxu0
        %v1457 = vmul.f32 %v1381, %v1308
        %v1458 = vmul.f32 %v1454, %v1309
        %v1461 = vrot.slane %v1146, 7
        %vm1462 = vcmask 1041409
        %v1463 = vsel %vm1462, %v1461, %v1145
        %v1465 = vadd.f32 %v627, %v1463
        %v1468 = vrot.slane %v1458, 7
        %v1469 = vsel %vm1462, %v1468, %v1457
        %v1471 = vadd.f32 %v1465, %v1469
        %v1472 = vtanh.pop %v1471
        %v1473 = vld [vmem:[#allocation8] sm:$0xff]
        %v1474 = vld [vmem:[#allocation8 + $0x8] sm:$0xff]
        %v1475 = vld [vmem:[#allocation8 + $0x10] sm:$0xff]
        %v1476 = vld [vmem:[#allocation8 + $0x18] sm:$0xff]
        %v1477 = vld [vmem:[#allocation8 + $0x20] sm:$0xff]
        %v1478 = vld [vmem:[#allocation8 + $0x28] sm:$0xff]
        %v1479 = vld [vmem:[#allocation8 + $0x30] sm:$0xff]
        %v1480 = vld [vmem:[#allocation8 + $0x38] sm:$0xff]
        %v1481 = vld [vmem:[#allocation8 + $0x40] sm:$0xff]
        %v1482 = vld [vmem:[#allocation8 + $0x48] sm:$0xff]
        %v1483 = vld [vmem:[#allocation8 + $0x50] sm:$0xff]
        %v1484 = vld [vmem:[#allocation8 + $0x58] sm:$0xff]
        %v1485 = vld [vmem:[#allocation8 + $0x60] sm:$0xff]
        %v1486 = vld [vmem:[#allocation8 + $0x68] sm:$0xff]
        %v1487 = vld [vmem:[#allocation8 + $0x70] sm:$0xff]
        %v1488 = vld [vmem:[#allocation8 + $0x78] sm:$0xff]
        %v1489 = vld [vmem:[#allocation8 + $0x80] sm:$0xff]
        %v1490 = vld [vmem:[#allocation8 + $0x88] sm:$0xff]
        %v1491 = vld [vmem:[#allocation8 + $0x90] sm:$0xff]
        %v1492 = vld [vmem:[#allocation8 + $0x98] sm:$0xff]
        %v1493 = vld [vmem:[#allocation8 + $0xa0] sm:$0xff]
        %v1494 = vld [vmem:[#allocation8 + $0xa8] sm:$0xff]
        %v1495 = vld [vmem:[#allocation8 + $0xb0] sm:$0xff]
        %v1496 = vld [vmem:[#allocation8 + $0xb8] sm:$0xff]
        %v1497 = vld [vmem:[#allocation8 + $0xc0] sm:$0xff]
        %v1498 = vld [vmem:[#allocation8 + $0xc8] sm:$0xff]
        %v1499 = vld [vmem:[#allocation8 + $0xd0] sm:$0xff]
        %v1500 = vld [vmem:[#allocation8 + $0xd8] sm:$0xff]
        %v1501 = vld [vmem:[#allocation8 + $0xe0] sm:$0xff]
        %v1502 = vld [vmem:[#allocation8 + $0xe8] sm:$0xff]
        %v1503 = vld [vmem:[#allocation8 + $0xf0] sm:$0xff]
        %v1504 = vld [vmem:[#allocation8 + $0xf8] sm:$0xff]
        %1505 = vmatprep.subr.mxu0 %v1504
        %1506 = vmatpush1.msra.mxu0 %v1503
        %1507 = vmatprep.subr.mxu0 %v1502
        %1508 = vmatpush1.msra.mxu0 %v1501
        %1509 = vmatprep.subr.mxu0 %v1500
        %1510 = vmatpush1.msra.mxu0 %v1499
        %1511 = vmatprep.subr.mxu0 %v1498
        %1512 = vmatpush1.msra.mxu0 %v1497
        %1513 = vmatprep.subr.mxu0 %v1496
        %1514 = vmatpush1.msra.mxu0 %v1495
        %1515 = vmatprep.subr.mxu0 %v1494
        %1516 = vmatpush1.msra.mxu0 %v1493
        %1517 = vmatprep.subr.mxu0 %v1492
        %1518 = vmatpush1.msra.mxu0 %v1491
        %1519 = vmatprep.subr.mxu0 %v1490
        %1520 = vmatpush1.msra.mxu0 %v1489
        %1521 = vmatprep.subr.mxu0 %v1488
        %1522 = vmatpush1.msra.mxu0 %v1487
        %1523 = vmatprep.subr.mxu0 %v1486
        %1524 = vmatpush1.msra.mxu0 %v1485
        %1525 = vmatprep.subr.mxu0 %v1484
        %1526 = vmatpush1.msra.mxu0 %v1483
        %1527 = vmatprep.subr.mxu0 %v1482
        %1528 = vmatpush1.msra.mxu0 %v1481
        %1529 = vmatprep.subr.mxu0 %v1480
        %1530 = vmatpush1.msra.mxu0 %v1479
        %1531 = vmatprep.subr.mxu0 %v1478
        %1532 = vmatpush1.msra.mxu0 %v1477
        %1533 = vmatprep.subr.mxu0 %v1476
        %1534 = vmatpush1.msra.mxu0 %v1475
        %1535 = vmatprep.subr.mxu0 %v1474
        %1536 = vmatpush1.msra.mxu0 %v1473
        %1537 = vmatprep.subr.mxu0 0.0
        %1538 = vmatpush2.msra.mxu0 0.0
        %1539 = vmatprep.subr.mxu0 0.0
        %1540 = vmatpush2.msra.mxu0 0.0
        %1541 = vmatprep.subr.mxu0 0.0
        %1542 = vmatpush2.msra.mxu0 0.0
        %1543 = vmatprep.subr.mxu0 0.0
        %1544 = vmatpush2.msra.mxu0 0.0
        %1545 = vmatprep.subr.mxu0 0.0
        %1546 = vmatpush2.msra.mxu0 0.0
        %1547 = vmatprep.subr.mxu0 0.0
        %1548 = vmatpush2.msra.mxu0 0.0
        %1549 = vmatprep.subr.mxu0 0.0
        %1550 = vmatpush2.msra.mxu0 0.0
        %1551 = vmatprep.subr.mxu0 0.0
        %1552 = vmatpush2.msra.mxu0 0.0
        %1553 = vmatprep.subr.mxu0 0.0
        %1554 = vmatpush2.msra.mxu0 0.0
        %1555 = vmatprep.subr.mxu0 0.0
        %1556 = vmatpush2.msra.mxu0 0.0
        %1557 = vmatprep.subr.mxu0 0.0
        %1558 = vmatpush2.msra.mxu0 0.0
        %1559 = vmatprep.subr.mxu0 0.0
        %1560 = vmatpush2.msra.mxu0 0.0
        %1561 = vmatprep.subr.mxu0 0.0
        %1562 = vmatpush2.msra.mxu0 0.0
        %1563 = vmatprep.subr.mxu0 0.0
        %1564 = vmatpush2.msra.mxu0 0.0
        %1565 = vmatprep.subr.mxu0 0.0
        %1566 = vmatpush2.msra.mxu0 0.0
        %1567 = vmatprep.subr.mxu0 0.0
        %1568 = vmatpush2.msra.mxu0 0.0
        %1569 = vmatprep.mubr.f32.mxu0 0.0
        %1570 = vmatmul.mubr.f32.gmra.mxu0 %v1472
        %v1571 = vpop.f32.mrf.mxu0
        %v1572 = vadd.f32 0.0, %v1571
        %v1573 = vpop.f32.mrf.mxu0
        %v1574 = vadd.f32 0.0, %v1573
        %1575 = vdwg.mxu0
        %v1576 = vadd.s32 %v966, 128
        %v1577 = vsel %vm995, %v1572, -inf
        %v1578 = vsel %vm995, %v1574, -inf
        %v1579 = vmax.f32 %v1577, %v1578
        %1580 = vmax.xlane.f32.xlu0 %v1579
        %v1581 = vpop.xlane.xlu0 %1580
        %vm1582 = vcmp.ge.f32.partialorder %v1572, %v1581
        %vm1583 = vcmp.ge.f32.partialorder %v1574, %v1581
        %v1584 = vsel %vm1582, %v966, 256
        %v1585 = vsel %vm1583, %v1576, 256
        %v1586 = vsel %vm995, %v1584, 2147483647
        %v1587 = vsel %vm995, %v1585, 2147483647
        %vm1588 = vcmp.lt.s32.totalorder %v1586, %v1587
        %v1589 = vsel %vm1588, %v1586, %v1587
        %v1590 = vand.u32 %v1589, 65535
        %v1591 = vshra.s32 %v1589, 16
        %v1592 = vcvt.s32.f32 %v1590
        %v1593 = vcvt.s32.f32 %v1591
        %1594 = vmin.xlane.f32.xlu0 %v1593
        %v1595 = vpop.xlane.xlu0 %1594
        %vm1596 = vcmp.eq.f32.partialorder %v1593, %v1595
        %v1597 = vsel %vm1596, %v1592, inf
        %1598 = vmin.xlane.f32.xlu0 %v1597
        %v1599 = vpop.xlane.xlu0 %1598
        %v1600 = vcvt.f32.s32 %v1599
        %v1601 = vcvt.f32.s32 %v1595
        %v1602 = vshll.u32 %v1601, 16
        %v1603 = vadd.s32 %v1602, %v1600
        %v1604 = vld [vmem:[#allocation5] sm:$0x3]
        %vm1605 = vcmp.gt.s32.totalorder %v1604, 0
        %v1606 = vsel %vm1605, %v1603, 0
        %vm1607 = vcmp.eq.s32.totalorder %v1606, 0
        %v1608 = vsel %vm1607, 0, %v1604
        %vm1609 = vcmask 1024
        %1610 = vst.msk [vmem:[#allocation5] sm:$0x3] %vm1609, %v1608
        %1611 = vset.pattern.permute.xlu0 0
        %1612 = vperm.xlu0 %1611, %v1606
        %v1613 = vpop.permute.xlu0 %1612
        %1614 = vst [vmem:[%s300] sm:$0x3] %v1613
        %vm1615 = vcmp.eq.s32.totalorder %v966, %v1613
        %vm1616 = vcmp.eq.s32.totalorder %v1576, %v1613
        %v1617 = vsel %vm1615, 1, 0
        %v1618 = vsel %vm1616, 1, 0
        %v1619 = vcvt.s32.f32 %v1617
        %v1620 = vcvt.s32.f32 %v1618
        %v1621 = vld [vmem:[#allocation10] sm:$0xff]
        %v1622 = vld [vmem:[#allocation10 + $0x8] sm:$0xff]
        %v1623 = vld [vmem:[#allocation10 + $0x10] sm:$0xff]
        %v1624 = vld [vmem:[#allocation10 + $0x18] sm:$0xff]
        %v1625 = vld [vmem:[#allocation10 + $0x20] sm:$0xff]
        %v1626 = vld [vmem:[#allocation10 + $0x28] sm:$0xff]
        %v1627 = vld [vmem:[#allocation10 + $0x30] sm:$0xff]
        %v1628 = vld [vmem:[#allocation10 + $0x38] sm:$0xff]
        %v1629 = vld [vmem:[#allocation10 + $0x40] sm:$0xff]
        %v1630 = vld [vmem:[#allocation10 + $0x48] sm:$0xff]
        %v1631 = vld [vmem:[#allocation10 + $0x50] sm:$0xff]
        %v1632 = vld [vmem:[#allocation10 + $0x58] sm:$0xff]
        %v1633 = vld [vmem:[#allocation10 + $0x60] sm:$0xff]
        %v1634 = vld [vmem:[#allocation10 + $0x68] sm:$0xff]
        %v1635 = vld [vmem:[#allocation10 + $0x70] sm:$0xff]
        %v1636 = vld [vmem:[#allocation10 + $0x78] sm:$0xff]
        %v1637 = vld [vmem:[#allocation10 + $0x80] sm:$0xff]
        %v1638 = vld [vmem:[#allocation10 + $0x88] sm:$0xff]
        %v1639 = vld [vmem:[#allocation10 + $0x90] sm:$0xff]
        %v1640 = vld [vmem:[#allocation10 + $0x98] sm:$0xff]
        %v1641 = vld [vmem:[#allocation10 + $0xa0] sm:$0xff]
        %v1642 = vld [vmem:[#allocation10 + $0xa8] sm:$0xff]
        %v1643 = vld [vmem:[#allocation10 + $0xb0] sm:$0xff]
        %v1644 = vld [vmem:[#allocation10 + $0xb8] sm:$0xff]
        %v1645 = vld [vmem:[#allocation10 + $0xc0] sm:$0xff]
        %v1646 = vld [vmem:[#allocation10 + $0xc8] sm:$0xff]
        %v1647 = vld [vmem:[#allocation10 + $0xd0] sm:$0xff]
        %v1648 = vld [vmem:[#allocation10 + $0xd8] sm:$0xff]
        %v1649 = vld [vmem:[#allocation10 + $0xe0] sm:$0xff]
        %v1650 = vld [vmem:[#allocation10 + $0xe8] sm:$0xff]
        %v1651 = vld [vmem:[#allocation10 + $0xf0] sm:$0xff]
        %v1652 = vld [vmem:[#allocation10 + $0xf8] sm:$0xff]
        %1653 = vmatprep.subr.mxu0 0.0
        %1654 = vmatpush1.msra.mxu0 %v1636
        %1655 = vmatprep.subr.mxu0 0.0
        %1656 = vmatpush1.msra.mxu0 %v1635
        %1657 = vmatprep.subr.mxu0 0.0
        %1658 = vmatpush1.msra.mxu0 %v1634
        %1659 = vmatprep.subr.mxu0 0.0
        %1660 = vmatpush1.msra.mxu0 %v1633
        %1661 = vmatprep.subr.mxu0 0.0
        %1662 = vmatpush1.msra.mxu0 %v1632
        %1663 = vmatprep.subr.mxu0 0.0
        %1664 = vmatpush1.msra.mxu0 %v1631
        %1665 = vmatprep.subr.mxu0 0.0
        %1666 = vmatpush1.msra.mxu0 %v1630
        %1667 = vmatprep.subr.mxu0 0.0
        %1668 = vmatpush1.msra.mxu0 %v1629
        %1669 = vmatprep.subr.mxu0 0.0
        %1670 = vmatpush1.msra.mxu0 %v1628
        %1671 = vmatprep.subr.mxu0 0.0
        %1672 = vmatpush1.msra.mxu0 %v1627
        %1673 = vmatprep.subr.mxu0 0.0
        %1674 = vmatpush1.msra.mxu0 %v1626
        %1675 = vmatprep.subr.mxu0 0.0
        %1676 = vmatpush1.msra.mxu0 %v1625
        %1677 = vmatprep.subr.mxu0 0.0
        %1678 = vmatpush1.msra.mxu0 %v1624
        %1679 = vmatprep.subr.mxu0 0.0
        %1680 = vmatpush1.msra.mxu0 %v1623
        %1681 = vmatprep.subr.mxu0 0.0
        %1682 = vmatpush1.msra.mxu0 %v1622
        %1683 = vmatprep.subr.mxu0 0.0
        %1684 = vmatpush1.msra.mxu0 %v1621
        %1685 = vmatprep.subr.mxu0 0.0
        %1686 = vmatpush2.msra.mxu0 %v1652
        %1687 = vmatprep.subr.mxu0 0.0
        %1688 = vmatpush2.msra.mxu0 %v1651
        %1689 = vmatprep.subr.mxu0 0.0
        %1690 = vmatpush2.msra.mxu0 %v1650
        %1691 = vmatprep.subr.mxu0 0.0
        %1692 = vmatpush2.msra.mxu0 %v1649
        %1693 = vmatprep.subr.mxu0 0.0
        %1694 = vmatpush2.msra.mxu0 %v1648
        %1695 = vmatprep.subr.mxu0 0.0
        %1696 = vmatpush2.msra.mxu0 %v1647
        %1697 = vmatprep.subr.mxu0 0.0
        %1698 = vmatpush2.msra.mxu0 %v1646
        %1699 = vmatprep.subr.mxu0 0.0
        %1700 = vmatpush2.msra.mxu0 %v1645
        %1701 = vmatprep.subr.mxu0 0.0
        %1702 = vmatpush2.msra.mxu0 %v1644
        %1703 = vmatprep.subr.mxu0 0.0
        %1704 = vmatpush2.msra.mxu0 %v1643
        %1705 = vmatprep.subr.mxu0 0.0
        %1706 = vmatpush2.msra.mxu0 %v1642
        %1707 = vmatprep.subr.mxu0 0.0
        %1708 = vmatpush2.msra.mxu0 %v1641
        %1709 = vmatprep.subr.mxu0 0.0
        %1710 = vmatpush2.msra.mxu0 %v1640
        %1711 = vmatprep.subr.mxu0 0.0
        %1712 = vmatpush2.msra.mxu0 %v1639
        %1713 = vmatprep.subr.mxu0 0.0
        %1714 = vmatpush2.msra.mxu0 %v1638
        %1715 = vmatprep.subr.mxu0 0.0
        %1716 = vmatpush2.msra.mxu0 %v1637
        %1717 = vmatprep.mubr.f32.mxu0 %v1620
        %1718 = vmatmul.mubr.f32.gmra.mxu0 %v1619
        %v1719 = vpop.f32.mrf.mxu0
        %v1720 = vadd.f32 0.0, %v1719
        %v1721 = vpop.f32.mrf.mxu0
        %1722 = vdwg.mxu0
        %1723 = vst [vmem:[#allocation4] sm:$0x3] %v1720
        %p1724 = scmp.lt.s32.totalorder %s20, 5
        %s1725 = scalar_select %p1724, %s20, 5
        %s1726 = smul.addr %s1725, 2
        %s1727 = scalar_lea.vmem %s7, %s1726
        // Predicated region
        $region65: #{_generate.1} parent=47 // pred_check
          %p1728 = pneg %p185
        $region66: #{_generate.1} parent=47 // pred_check_branch
          %1730 = sbr.rel (%p1728) target = $region68
        $region67: #{_generate.1} parent=47 // pred_region
          _
        $region68: #{_generate.1} parent=47 // pred_fallthru
          _
      $region48: #{_generate.1} parent=5 // pred_fallthru
        _
      %p1731 = scmp.le.s32.totalorder 2, %s15
      // Predicated region
      $region69: #{_generate.1} parent=5 // pred_check
        %p1732 = pneg %p1731
      $region70: #{_generate.1} parent=5 // pred_check_branch
        %1734 = sbr.rel (%p1732) target = $region72
      $region71: #{_generate.1} parent=5 // pred_region
        %s1735 = ssub.s32 %s15, 2
        // Predicated region
        $region73: #{_generate.1} parent=71 // pred_check
          %p1736 = pneg %p191
        $region74: #{_generate.1} parent=71 // pred_check_branch
          %1738 = sbr.rel (%p1736) target = $region76
        $region75: #{_generate.1} parent=71 // pred_region
          %p1739 = scmp.lt.s32.totalorder %s21, 5
          %s1740 = scalar_select %p1739, %s21, 5
          %s1741 = smul.addr %s1740, 2
          %s1742 = scalar_lea.vmem %s7, %s1741
        $region76: #{_generate.1} parent=71 // pred_fallthru
          _
      $region72: #{_generate.1} parent=5 // pred_fallthru
        _
    $region6: #{_generate.1} parent=1 // loop_footer
      %s19 = sadd.s32 1, %s15
    $region7: #{_generate.1} parent=1 // loop_footer_branch
      %14 = sbr.rel target = $region3
    $region8: #{_generate.1} parent=1 // loop_exit
      _
    %1743 = vsyncpa [#allocation7], 1
    %s1744 = scalar_lea.sflag [#allocation7], 1
    %1745 = vsyncpa %s1744, 1
    %1746 = vsyncpa [#allocation9], 1

</llo_original>
